<compile_context>
chip_gen: v7x
topology: tpu7x:2x2x1
jax: 0.10.0
libtpu: 0.0.40
codegen_flags: <defaults>
</compile_context>

<pallas_src>
import functools
import math

import jax
import jax.numpy as jnp
from jax.experimental import pallas as pl
from jax.experimental.pallas import tpu as pltpu


_LN_EPS = 1e-5
_ATTN_EPS = 1e-6


def _pick_vmem_limit():
    """~3/4 of physical VMEM, capped at 96 MiB (v5e/v6e: 96 MiB, v7x: 48 MiB)."""
    try:
        cap = pltpu.get_tpu_info().vmem_capacity_bytes
        return int(min(96 * 1024 * 1024, (cap * 3) // 4))
    except Exception:
        return 32 * 1024 * 1024


_VMEM_LIMIT = _pick_vmem_limit()


# ---------------------------------------------------------------------------
# in-kernel helpers (f32 elementwise math)
# ---------------------------------------------------------------------------

def _layernorm(x, gamma, beta):
    """Row-wise LayerNorm (eps=1e-5, like torch.nn.LayerNorm)."""
    mu = jnp.mean(x, axis=-1, keepdims=True)
    var = jnp.mean((x - mu) ** 2, axis=-1, keepdims=True)
    return (x - mu) * jax.lax.rsqrt(var + _LN_EPS) * gamma + beta


def _elu1(x):
    """elu(x) + 1 feature map (linear-attention kernel feature)."""
    return jnp.where(x > 0, x + 1.0, jnp.exp(jnp.minimum(x, 0.0)))


# ---------------------------------------------------------------------------
# Pallas kernels
# ---------------------------------------------------------------------------

def _proj_pe_kernel(x_ref, w_ref, pe_ref, o_ref, *, scale):
    """Conv1d(k=1, no bias) as one (B*T,F)@(F,D) matmul + sqrt(D) scale + PE."""
    b, t, f = x_ref.shape
    x2d = x_ref[...].astype(w_ref.dtype).reshape(b * t, f)        # bf16 MXU input
    h = jnp.dot(x2d, w_ref[...], preferred_element_type=jnp.float32)
    h = h.reshape(b, t, -1) * scale + pe_ref[...].astype(jnp.float32)[None]
    o_ref[...] = h.astype(o_ref.dtype)


def _layer_kernel(h_in_ref, mask_ref,
                  ln1_g_ref, ln1_b_ref, wqkv_ref, bqkv_ref, wo_ref, bo_ref,
                  ln2_g_ref, ln2_b_ref, w1_ref, b1_ref, w2_ref, b2_ref,
                  h_out_ref):
    """One full pre-LN transformer layer (attention + FFN, both residuals).

    Grid = (batch_blocks, L). The output block index is constant along L, so the
    (Bt, T, D) activation stays resident in VMEM across every layer; per-layer
    weights are selected by the layer grid index and prefetched by the pipeline.
    """
    l = pl.program_id(1)

    @pl.when(l == 0)
    def _():
        h_out_ref[...] = h_in_ref[...]                             # seed resident act

    h = h_out_ref[...].astype(jnp.float32)                         # (Bt, T, D)
    bt, t, d = h.shape
    h2d = h.reshape(bt * t, d)

    # ---------------- attention sub-block (pre-LN, linear attention) --------
    xn = _layernorm(h2d, ln1_g_ref[0], ln1_b_ref[0])               # (Bt*T, D)

    # fused Q|K|V projection: one (Bt*T,D) @ (D,3D) MXU matmul (bf16 weights)
    qkv = jnp.dot(xn.astype(wqkv_ref.dtype), wqkv_ref[0],
                  preferred_element_type=jnp.float32) + bqkv_ref[0]  # (Bt*T, 3D)
    phi_q = _elu1(qkv[:, :d]).reshape(bt, t, d)
    phi_k = _elu1(qkv[:, d:2 * d]).reshape(bt, t, d)
    v = qkv[:, 2 * d:].reshape(bt, t, d)

    # whole-slab linear attention with an exact 0/1 block-diagonal head mask:
    #   KV[b] = phi_k[b]^T @ V[b]  (batched dot_general, contracting T; no
    #   materialized transpose), zero cross-head terms, then one big matmul.
    mask = mask_ref[...]                                            # (D, D) 0/1 f32
    kv = jnp.einsum('btd,bte->bde', phi_k, v,
                    preferred_element_type=jnp.float32)             # (Bt, D, D)
    kv = kv * mask[None]
    num = jnp.einsum('btd,bde->bte', phi_q, kv,
                     preferred_element_type=jnp.float32)            # (Bt, T, D)

    ksum = jnp.sum(phi_k, axis=1, keepdims=True)                    # (Bt, 1, D)
    den = jnp.dot((phi_q * ksum).reshape(bt * t, d), mask,
                  preferred_element_type=jnp.float32)               # (Bt*T, D)
    attn = num.reshape(bt * t, d) * pl.reciprocal(den + _ATTN_EPS, approx=True)

    out = jnp.dot(attn.astype(wo_ref.dtype), wo_ref[0],
                  preferred_element_type=jnp.float32) + bo_ref[0]
    h2d = h2d + out                                                 # residual

    # ---------------- feed-forward sub-block (pre-LN) -----------------------
    xn2 = _layernorm(h2d, ln2_g_ref[0], ln2_b_ref[0])
    ff = jnp.dot(xn2.astype(w1_ref.dtype), w1_ref[0],
                 preferred_element_type=jnp.float32) + b1_ref[0]
    ff = jnp.maximum(ff, 0.0)
    ff = jnp.dot(ff.astype(w2_ref.dtype), w2_ref[0],
                 preferred_element_type=jnp.float32) + b2_ref[0]
    h2d = h2d + ff                                                  # residual

    h_out_ref[...] = h2d.reshape(bt, t, d).astype(h_out_ref.dtype)


def _tail_kernel(h_ref, gf_ref, bf_ref, p1w_ref, p1b_ref, p2w_ref, p2b_ref,
                 hw_ref, hb_ref, o_ref):
    """Final LN + ffn_fusion (p2(relu(p1(x))) + x) + mean-pool + head, whole batch."""
    h = h_ref[...].astype(jnp.float32)                              # (B, T, D)
    b, t, d = h.shape
    h2d = h.reshape(b * t, d)
    hn = _layernorm(h2d, gf_ref[...], bf_ref[...])
    fused = jnp.dot(hn.astype(p1w_ref.dtype), p1w_ref[...],
                    preferred_element_type=jnp.float32) + p1b_ref[...]
    fused = jnp.maximum(fused, 0.0)
    fused = jnp.dot(fused.astype(p2w_ref.dtype), p2w_ref[...],
                    preferred_element_type=jnp.float32) + p2b_ref[...]
    # ffn_fusion residual around the encoder output (assumed post final-LN).
    h2 = (hn + fused).reshape(b, t, d)
    pooled = jnp.mean(h2, axis=1)                                   # (B, D)
    out = jnp.dot(pooled.astype(hw_ref.dtype), hw_ref[...],
                  preferred_element_type=jnp.float32) + hb_ref[...]  # (B, O)
    o_ref[...] = out.astype(o_ref.dtype)


# ---------------------------------------------------------------------------
# pallas_call wrappers
# ---------------------------------------------------------------------------

def _full_spec(shape):
    """Whole-array block for a single-step grid."""
    n = len(shape)
    return pl.BlockSpec(shape, lambda i, _n=n: (0,) * _n)


def project_embed(x, w, pe, scale):
    b, t, f = x.shape
    d = w.shape[1]
    return pl.pallas_call(
        functools.partial(_proj_pe_kernel, scale=scale),
        out_shape=jax.ShapeDtypeStruct((b, t, d), x.dtype),
        grid=(1,),
        in_specs=[_full_spec((b, t, f)), _full_spec((f, d)), _full_spec((t, d))],
        out_specs=_full_spec((b, t, d)),
        compiler_params=pltpu.CompilerParams(
            dimension_semantics=("arbitrary",),
            vmem_limit_bytes=_VMEM_LIMIT),
    )(x, w, pe)


def encoder_layers(h, params, head_mask, batch_block=None):
    """All L transformer layers in a single pallas_call, grid=(batch_blocks, L)."""
    b, t, d = h.shape
    n_layers = params["wqkv"].shape[0]
    if n_layers == 0:
        return h
    bt = b if batch_block is None else batch_block
    assert b % bt == 0
    nb = b // bt

    act_spec = pl.BlockSpec((bt, t, d), lambda bi, li: (bi, 0, 0))
    mask_spec = pl.BlockSpec((d, d), lambda bi, li: (0, 0))

    def lspec(arr):  # stacked per-layer param (L, r, c) -> (1, r, c) block at layer li
        shp = arr.shape
        return pl.BlockSpec((1,) + shp[1:], lambda bi, li: (li, 0, 0))

    layer_args = [params[k] for k in ("ln1_g", "ln1_b", "wqkv", "bqkv", "wo", "bo",
                                      "ln2_g", "ln2_b", "w1", "b1", "w2", "b2")]

    return pl.pallas_call(
        _layer_kernel,
        out_shape=jax.ShapeDtypeStruct((b, t, d), h.dtype),
        grid=(nb, n_layers),
        in_specs=[act_spec, mask_spec] + [lspec(a) for a in layer_args],
        out_specs=act_spec,
        compiler_params=pltpu.CompilerParams(
            dimension_semantics=("parallel", "arbitrary"),
            vmem_limit_bytes=_VMEM_LIMIT),
    )(h, head_mask, *layer_args)


def tail_head(h, params):
    b, t, d = h.shape
    o = params["head_w"].shape[1]
    return pl.pallas_call(
        _tail_kernel,
        out_shape=jax.ShapeDtypeStruct((b, o), h.dtype),
        grid=(1,),
        in_specs=[_full_spec((b, t, d)),
                  _full_spec((1, d)), _full_spec((1, d)),
                  _full_spec((d, d)), _full_spec((1, d)),
                  _full_spec((d, d)), _full_spec((1, d)),
                  _full_spec((d, o)), _full_spec((1, o))],
        out_specs=_full_spec((b, o)),
        compiler_params=pltpu.CompilerParams(
            dimension_semantics=("arbitrary",),
            vmem_limit_bytes=_VMEM_LIMIT),
    )(h, params["ln_f_g"], params["ln_f_b"],
      params["p1_w"], params["p1_b"], params["p2_w"], params["p2_b"],
      params["head_w"], params["head_b"])


# ---------------------------------------------------------------------------
# Parameters, positional encoding, head mask
# ---------------------------------------------------------------------------

def init_params(key, input_dim, d_model, n_layers, n_heads, ffn_dim, head_out):
    """Matmul weights in bf16 (half DMA/VMEM; native MXU dtype); LN/bias in f32.
    Per-layer weights are stacked along a leading L axis for the layer grid."""
    assert d_model % n_heads == 0

    def nrm(k, shape, scale=0.02):
        return (scale * jax.random.normal(k, shape, dtype=jnp.float32)
                ).astype(jnp.bfloat16)

    ks = jax.random.split(key, 8)
    l = n_layers
    return {
        # Conv1d(in=input_dim, out=d_model, k=1, bias=False) stored as (in, out)
        "proj_w": nrm(ks[0], (input_dim, d_model)),
        # stacked encoder layer parameters
        "ln1_g": jnp.ones((l, 1, d_model), jnp.float32),
        "ln1_b": jnp.zeros((l, 1, d_model), jnp.float32),
        "wqkv": nrm(ks[1], (l, d_model, 3 * d_model)),
        "bqkv": jnp.zeros((l, 1, 3 * d_model), jnp.float32),
        "wo": nrm(ks[2], (l, d_model, d_model)),
        "bo": jnp.zeros((l, 1, d_model), jnp.float32),
        "ln2_g": jnp.ones((l, 1, d_model), jnp.float32),
        "ln2_b": jnp.zeros((l, 1, d_model), jnp.float32),
        "w1": nrm(ks[3], (l, d_model, ffn_dim)),
        "b1": jnp.zeros((l, 1, ffn_dim), jnp.float32),
        "w2": nrm(ks[4], (l, ffn_dim, d_model)),
        "b2": jnp.zeros((l, 1, d_model), jnp.float32),
        # final encoder LN
        "ln_f_g": jnp.ones((1, d_model), jnp.float32),
        "ln_f_b": jnp.zeros((1, d_model), jnp.float32),
        # ffn_fusion: projection_1 / projection_2 (Linear d_model -> d_model)
        "p1_w": nrm(ks[5], (d_model, d_model)),
        "p1_b": jnp.zeros((1, d_model), jnp.float32),
        "p2_w": nrm(ks[6], (d_model, d_model)),
        "p2_b": jnp.zeros((1, d_model), jnp.float32),
        # output head (mean-pool + Linear)
        "head_w": nrm(ks[7], (d_model, head_out)),
        "head_b": jnp.zeros((1, head_out), jnp.float32),
    }


def sinusoidal_pe(t, d):
    pos = jnp.arange(t, dtype=jnp.float32)[:, None]
    i = jnp.arange(0, d, 2, dtype=jnp.float32)
    angles = pos / jnp.power(10000.0, i / d)
    pe = jnp.zeros((t, d), jnp.float32)
    pe = pe.at[:, 0::2].set(jnp.sin(angles))
    pe = pe.at[:, 1::2].set(jnp.cos(angles))
    return pe


def build_head_mask(d_model, n_heads):
    """Exact 0/1 block-diagonal (dh x dh per head) mask for whole-slab attention."""
    dh = d_model // n_heads
    hid = jnp.arange(d_model, dtype=jnp.int32) // dh
    return (hid[:, None] == hid[None, :]).astype(jnp.float32)


# ---------------------------------------------------------------------------
# LinT forward (inference)
# ---------------------------------------------------------------------------

def lint_forward(params, x, n_heads):
    """x: (B, T, F) float32 -> dict of head outputs."""
    b, t, f = x.shape
    d_model = params["proj_w"].shape[1]
    assert d_model % n_heads == 0

    # _apply_projection (dropout = identity) fused with the encoder embedding
    # scale (sqrt(d_model)) and sinusoidal positional-encoding add.
    pe = sinusoidal_pe(t, d_model)
    h = project_embed(x, params["proj_w"], pe, float(math.sqrt(d_model)))

    # self_attention_transformer: all layers in one pallas_call, activation
    # VMEM-resident across the "arbitrary" layer axis.
    mask = build_head_mask(d_model, n_heads)
    h = encoder_layers(h, params, mask)

    # final encoder LN + ffn_fusion residual + mean-pool + output head, fused.
    out = tail_head(h, params)
    return {"head_0": out}


# ---------------------------------------------------------------------------
# main
# ---------------------------------------------------------------------------

if __name__ == "__main__":
    B, T, F_IN = 2, 8, 16                 # (B, T, F) input, per forward docstring
    D_MODEL, N_HEADS, N_LAYERS = 32, 4, 2
    FFN_DIM, HEAD_OUT = 4 * D_MODEL, 3

    key = jax.random.PRNGKey(0)
    k_param, k_x = jax.random.split(key)
    params = init_params(k_param, F_IN, D_MODEL, N_LAYERS, N_HEADS, FFN_DIM, HEAD_OUT)
    x = jax.random.normal(k_x, (B, T, F_IN), dtype=jnp.float32)

    fwd = jax.jit(functools.partial(lint_forward, n_heads=N_HEADS))
    outputs = fwd(params, x)
    out = jax.block_until_ready(outputs["head_0"])
    assert out.shape == (B, HEAD_OUT)
    assert bool(jnp.all(jnp.isfinite(out)))
    print("KERNEL_OK")
</pallas_src>

<mosaic_0001>
module attributes {stable_mosaic.version = 11 : i64} {
  func.func @_tail_kernel(%arg0: i32, %arg1: memref<2x8x32xf32, #tpu.memory_space<vmem>>, %arg2: memref<1x32xf32, #tpu.memory_space<vmem>>, %arg3: memref<1x32xf32, #tpu.memory_space<vmem>>, %arg4: memref<32x32xbf16, #tpu.memory_space<vmem>>, %arg5: memref<1x32xf32, #tpu.memory_space<vmem>>, %arg6: memref<32x32xbf16, #tpu.memory_space<vmem>>, %arg7: memref<1x32xf32, #tpu.memory_space<vmem>>, %arg8: memref<32x3xbf16, #tpu.memory_space<vmem>>, %arg9: memref<1x3xf32, #tpu.memory_space<vmem>>, %arg10: memref<2x3xf32, #tpu.memory_space<vmem>>) attributes {dimension_semantics = [#tpu.dimension_semantics<arbitrary>], iteration_bounds = array<i64: 1>, scalar_prefetch = 0 : i64, scratch_operands = 0 : i64, tpu.core_type = #tpu.core_type<tc>, window_params = [{pipeline_mode = #tpu.pipeline_mode<synchronous>, transform_indices = @transform_0, window_bounds = array<i64: 2, 8, 32>}, {pipeline_mode = #tpu.pipeline_mode<synchronous>, transform_indices = @transform_1, window_bounds = array<i64: 1, 32>}, {pipeline_mode = #tpu.pipeline_mode<synchronous>, transform_indices = @transform_2, window_bounds = array<i64: 1, 32>}, {pipeline_mode = #tpu.pipeline_mode<synchronous>, transform_indices = @transform_3, window_bounds = array<i64: 32, 32>}, {pipeline_mode = #tpu.pipeline_mode<synchronous>, transform_indices = @transform_4, window_bounds = array<i64: 1, 32>}, {pipeline_mode = #tpu.pipeline_mode<synchronous>, transform_indices = @transform_5, window_bounds = array<i64: 32, 32>}, {pipeline_mode = #tpu.pipeline_mode<synchronous>, transform_indices = @transform_6, window_bounds = array<i64: 1, 32>}, {pipeline_mode = #tpu.pipeline_mode<synchronous>, transform_indices = @transform_7, window_bounds = array<i64: 32, 3>}, {pipeline_mode = #tpu.pipeline_mode<synchronous>, transform_indices = @transform_8, window_bounds = array<i64: 1, 3>}, {pipeline_mode = #tpu.pipeline_mode<synchronous>, transform_indices = @transform_9, window_bounds = array<i64: 2, 3>}]} {
    %c0 = arith.constant 0 : index
    %c0_0 = arith.constant 0 : index
    %c0_1 = arith.constant 0 : index
    %0 = vector.load %arg1[%c0, %c0_0, %c0_1] : memref<2x8x32xf32, #tpu.memory_space<vmem>>, vector<2x8x32xf32>
    %1 = vector.shape_cast %0 : vector<2x8x32xf32> to vector<16x32xf32>
    %c0_2 = arith.constant 0 : index
    %c0_3 = arith.constant 0 : index
    %2 = vector.load %arg2[%c0_2, %c0_3] : memref<1x32xf32, #tpu.memory_space<vmem>>, vector<1x32xf32>
    %c0_4 = arith.constant 0 : index
    %c0_5 = arith.constant 0 : index
    %3 = vector.load %arg3[%c0_4, %c0_5] : memref<1x32xf32, #tpu.memory_space<vmem>>, vector<1x32xf32>
    %cst = arith.constant dense<0.000000e+00> : vector<16xf32>
    %4 = vector.multi_reduction <add>, %1, %cst [1] : vector<16x32xf32> to vector<16xf32>
    %5 = vector.shape_cast %4 : vector<16xf32> to vector<16x1xf32>
    %cst_6 = arith.constant 3.200000e+01 : f32
    %6 = vector.broadcast %cst_6 : f32 to vector<16x1xf32>
    %7 = arith.divf %5, %6 : vector<16x1xf32>
    %8 = vector.broadcast %7 : vector<16x1xf32> to vector<16x32xf32>
    %9 = arith.subf %1, %8 : vector<16x32xf32>
    %10 = arith.mulf %9, %9 : vector<16x32xf32>
    %cst_7 = arith.constant dense<0.000000e+00> : vector<16xf32>
    %11 = vector.multi_reduction <add>, %10, %cst_7 [1] : vector<16x32xf32> to vector<16xf32>
    %12 = vector.shape_cast %11 : vector<16xf32> to vector<16x1xf32>
    %cst_8 = arith.constant 3.200000e+01 : f32
    %13 = vector.broadcast %cst_8 : f32 to vector<16x1xf32>
    %14 = arith.divf %12, %13 : vector<16x1xf32>
    %15 = vector.broadcast %7 : vector<16x1xf32> to vector<16x32xf32>
    %16 = arith.subf %1, %15 : vector<16x32xf32>
    %cst_9 = arith.constant 9.99999974E-6 : f32
    %17 = vector.broadcast %cst_9 : f32 to vector<16x1xf32>
    %18 = arith.addf %14, %17 : vector<16x1xf32>
    %19 = math.rsqrt %18 : vector<16x1xf32>
    %20 = vector.broadcast %19 : vector<16x1xf32> to vector<16x32xf32>
    %21 = arith.mulf %16, %20 : vector<16x32xf32>
    %22 = vector.broadcast %2 : vector<1x32xf32> to vector<16x32xf32>
    %23 = arith.mulf %21, %22 : vector<16x32xf32>
    %24 = vector.broadcast %3 : vector<1x32xf32> to vector<16x32xf32>
    %25 = arith.addf %23, %24 : vector<16x32xf32>
    %26 = arith.truncf %25 : vector<16x32xf32> to vector<16x32xbf16>
    %c0_10 = arith.constant 0 : index
    %c0_11 = arith.constant 0 : index
    %27 = vector.load %arg4[%c0_10, %c0_11] : memref<32x32xbf16, #tpu.memory_space<vmem>>, vector<32x32xbf16>
    %cst_12 = arith.constant dense<0.000000e+00> : vector<16x32xf32>
    %28 = tpu.matmul %26, %27, %cst_12 {dimension_numbers = #tpu.dot_dimension_numbers<[1], [0], [0], [1], [0, 0, 1, 1], [], []>} : vector<16x32xbf16>, vector<32x32xbf16>, vector<16x32xf32> -> vector<16x32xf32>
    %c0_13 = arith.constant 0 : index
    %c0_14 = arith.constant 0 : index
    %29 = vector.load %arg5[%c0_13, %c0_14] : memref<1x32xf32, #tpu.memory_space<vmem>>, vector<1x32xf32>
    %30 = vector.broadcast %29 : vector<1x32xf32> to vector<16x32xf32>
    %31 = arith.addf %28, %30 : vector<16x32xf32>
    %cst_15 = arith.constant 0.000000e+00 : f32
    %32 = vector.broadcast %cst_15 : f32 to vector<16x32xf32>
    %33 = arith.maximumf %31, %32 : vector<16x32xf32>
    %34 = arith.truncf %33 : vector<16x32xf32> to vector<16x32xbf16>
    %c0_16 = arith.constant 0 : index
    %c0_17 = arith.constant 0 : index
    %35 = vector.load %arg6[%c0_16, %c0_17] : memref<32x32xbf16, #tpu.memory_space<vmem>>, vector<32x32xbf16>
    %cst_18 = arith.constant dense<0.000000e+00> : vector<16x32xf32>
    %36 = tpu.matmul %34, %35, %cst_18 {dimension_numbers = #tpu.dot_dimension_numbers<[1], [0], [0], [1], [0, 0, 1, 1], [], []>} : vector<16x32xbf16>, vector<32x32xbf16>, vector<16x32xf32> -> vector<16x32xf32>
    %c0_19 = arith.constant 0 : index
    %c0_20 = arith.constant 0 : index
    %37 = vector.load %arg7[%c0_19, %c0_20] : memref<1x32xf32, #tpu.memory_space<vmem>>, vector<1x32xf32>
    %38 = vector.broadcast %37 : vector<1x32xf32> to vector<16x32xf32>
    %39 = arith.addf %36, %38 : vector<16x32xf32>
    %40 = arith.addf %25, %39 : vector<16x32xf32>
    %41 = vector.shape_cast %40 : vector<16x32xf32> to vector<2x8x32xf32>
    %cst_21 = arith.constant dense<0.000000e+00> : vector<2x32xf32>
    %42 = vector.multi_reduction <add>, %41, %cst_21 [1] : vector<2x8x32xf32> to vector<2x32xf32>
    %cst_22 = arith.constant 8.000000e+00 : f32
    %43 = vector.broadcast %cst_22 : f32 to vector<2x32xf32>
    %44 = arith.divf %42, %43 : vector<2x32xf32>
    %45 = arith.truncf %44 : vector<2x32xf32> to vector<2x32xbf16>
    %c0_23 = arith.constant 0 : index
    %c0_24 = arith.constant 0 : index
    %46 = vector.load %arg8[%c0_23, %c0_24] : memref<32x3xbf16, #tpu.memory_space<vmem>>, vector<32x3xbf16>
    %cst_25 = arith.constant dense<0.000000e+00> : vector<2x3xf32>
    %47 = tpu.matmul %45, %46, %cst_25 {dimension_numbers = #tpu.dot_dimension_numbers<[1], [0], [0], [1], [0, 0, 1, 1], [], []>} : vector<2x32xbf16>, vector<32x3xbf16>, vector<2x3xf32> -> vector<2x3xf32>
    %c0_26 = arith.constant 0 : index
    %c0_27 = arith.constant 0 : index
    %48 = vector.load %arg9[%c0_26, %c0_27] : memref<1x3xf32, #tpu.memory_space<vmem>>, vector<1x3xf32>
    %49 = vector.broadcast %48 : vector<1x3xf32> to vector<2x3xf32>
    %50 = arith.addf %47, %49 : vector<2x3xf32>
    %c0_28 = arith.constant 0 : index
    %c0_29 = arith.constant 0 : index
    %51 = vector.load %arg10[%c0_28, %c0_29] : memref<2x3xf32, #tpu.memory_space<vmem>>, vector<2x3xf32>
    tpu.vector_store %arg10[%c0_28, %c0_29], %50 {strides = array<i32>} : memref<2x3xf32, #tpu.memory_space<vmem>>, vector<2x3xf32>,
    return
  }
  func.func @transform_0(%arg0: i32) -> (i32, i32, i32) {
    %c0_i32 = arith.constant 0 : i32
    %c0_i32_0 = arith.constant 0 : i32
    %c0_i32_1 = arith.constant 0 : i32
    %c0_i32_2 = arith.constant 0 : i32
    return %c0_i32, %c0_i32_0, %c0_i32_1 : i32, i32, i32
  }
  func.func @transform_1(%arg0: i32) -> (i32, i32) {
    %c0_i32 = arith.constant 0 : i32
    %c0_i32_0 = arith.constant 0 : i32
    %c0_i32_1 = arith.constant 0 : i32
    return %c0_i32, %c0_i32_0 : i32, i32
  }
  func.func @transform_2(%arg0: i32) -> (i32, i32) {
    %c0_i32 = arith.constant 0 : i32
    %c0_i32_0 = arith.constant 0 : i32
    %c0_i32_1 = arith.constant 0 : i32
    return %c0_i32, %c0_i32_0 : i32, i32
  }
  func.func @transform_3(%arg0: i32) -> (i32, i32) {
    %c0_i32 = arith.constant 0 : i32
    %c0_i32_0 = arith.constant 0 : i32
    %c0_i32_1 = arith.constant 0 : i32
    return %c0_i32, %c0_i32_0 : i32, i32
  }
  func.func @transform_4(%arg0: i32) -> (i32, i32) {
    %c0_i32 = arith.constant 0 : i32
    %c0_i32_0 = arith.constant 0 : i32
    %c0_i32_1 = arith.constant 0 : i32
    return %c0_i32, %c0_i32_0 : i32, i32
  }
  func.func @transform_5(%arg0: i32) -> (i32, i32) {
    %c0_i32 = arith.constant 0 : i32
    %c0_i32_0 = arith.constant 0 : i32
    %c0_i32_1 = arith.constant 0 : i32
    return %c0_i32, %c0_i32_0 : i32, i32
  }
  func.func @transform_6(%arg0: i32) -> (i32, i32) {
    %c0_i32 = arith.constant 0 : i32
    %c0_i32_0 = arith.constant 0 : i32
    %c0_i32_1 = arith.constant 0 : i32
    return %c0_i32, %c0_i32_0 : i32, i32
  }
  func.func @transform_7(%arg0: i32) -> (i32, i32) {
    %c0_i32 = arith.constant 0 : i32
    %c0_i32_0 = arith.constant 0 : i32
    %c0_i32_1 = arith.constant 0 : i32
    return %c0_i32, %c0_i32_0 : i32, i32
  }
  func.func @transform_8(%arg0: i32) -> (i32, i32) {
    %c0_i32 = arith.constant 0 : i32
    %c0_i32_0 = arith.constant 0 : i32
    %c0_i32_1 = arith.constant 0 : i32
    return %c0_i32, %c0_i32_0 : i32, i32
  }
  func.func @transform_9(%arg0: i32) -> (i32, i32) {
    %c0_i32 = arith.constant 0 : i32
    %c0_i32_0 = arith.constant 0 : i32
    %c0_i32_1 = arith.constant 0 : i32
    return %c0_i32, %c0_i32_0 : i32, i32
  }
}

module attributes {stable_mosaic.version = 11 : i64} {
  func.func @_proj_pe_kernel(%arg0: i32, %arg1: memref<2x8x16xf32, #tpu.memory_space<vmem>>, %arg2: memref<16x32xbf16, #tpu.memory_space<vmem>>, %arg3: memref<8x32xf32, #tpu.memory_space<vmem>>, %arg4: memref<2x8x32xf32, #tpu.memory_space<vmem>>) attributes {dimension_semantics = [#tpu.dimension_semantics<arbitrary>], iteration_bounds = array<i64: 1>, scalar_prefetch = 0 : i64, scratch_operands = 0 : i64, tpu.core_type = #tpu.core_type<tc>, window_params = [{pipeline_mode = #tpu.pipeline_mode<synchronous>, transform_indices = @transform_0, window_bounds = array<i64: 2, 8, 16>}, {pipeline_mode = #tpu.pipeline_mode<synchronous>, transform_indices = @transform_1, window_bounds = array<i64: 16, 32>}, {pipeline_mode = #tpu.pipeline_mode<synchronous>, transform_indices = @transform_2, window_bounds = array<i64: 8, 32>}, {pipeline_mode = #tpu.pipeline_mode<synchronous>, transform_indices = @transform_3, window_bounds = array<i64: 2, 8, 32>}]} {
    %c0 = arith.constant 0 : index
    %c0_0 = arith.constant 0 : index
    %c0_1 = arith.constant 0 : index
    %0 = vector.load %arg1[%c0, %c0_0, %c0_1] : memref<2x8x16xf32, #tpu.memory_space<vmem>>, vector<2x8x16xf32>
    %1 = arith.truncf %0 : vector<2x8x16xf32> to vector<2x8x16xbf16>
    %2 = vector.shape_cast %1 : vector<2x8x16xbf16> to vector<16x16xbf16>
    %c0_2 = arith.constant 0 : index
    %c0_3 = arith.constant 0 : index
    %3 = vector.load %arg2[%c0_2, %c0_3] : memref<16x32xbf16, #tpu.memory_space<vmem>>, vector<16x32xbf16>
    %cst = arith.constant dense<0.000000e+00> : vector<16x32xf32>
    %4 = tpu.matmul %2, %3, %cst {dimension_numbers = #tpu.dot_dimension_numbers<[1], [0], [0], [1], [0, 0, 1, 1], [], []>} : vector<16x16xbf16>, vector<16x32xbf16>, vector<16x32xf32> -> vector<16x32xf32>
    %5 = vector.shape_cast %4 : vector<16x32xf32> to vector<2x8x32xf32>
    %cst_4 = arith.constant 5.65685415 : f32
    %6 = vector.broadcast %cst_4 : f32 to vector<2x8x32xf32>
    %7 = arith.mulf %5, %6 : vector<2x8x32xf32>
    %c0_5 = arith.constant 0 : index
    %c0_6 = arith.constant 0 : index
    %8 = vector.load %arg3[%c0_5, %c0_6] : memref<8x32xf32, #tpu.memory_space<vmem>>, vector<8x32xf32>
    %9 = vector.shape_cast %8 : vector<8x32xf32> to vector<1x8x32xf32>
    %10 = vector.broadcast %9 : vector<1x8x32xf32> to vector<2x8x32xf32>
    %11 = arith.addf %7, %10 : vector<2x8x32xf32>
    %c0_7 = arith.constant 0 : index
    %c0_8 = arith.constant 0 : index
    %c0_9 = arith.constant 0 : index
    %12 = vector.load %arg4[%c0_7, %c0_8, %c0_9] : memref<2x8x32xf32, #tpu.memory_space<vmem>>, vector<2x8x32xf32>
    tpu.vector_store %arg4[%c0_7, %c0_8, %c0_9], %11 {strides = array<i32>} : memref<2x8x32xf32, #tpu.memory_space<vmem>>, vector<2x8x32xf32>,
    return
  }
  func.func @transform_0(%arg0: i32) -> (i32, i32, i32) {
    %c0_i32 = arith.constant 0 : i32
    %c0_i32_0 = arith.constant 0 : i32
    %c0_i32_1 = arith.constant 0 : i32
    %c0_i32_2 = arith.constant 0 : i32
    return %c0_i32, %c0_i32_0, %c0_i32_1 : i32, i32, i32
  }
  func.func @transform_1(%arg0: i32) -> (i32, i32) {
    %c0_i32 = arith.constant 0 : i32
    %c0_i32_0 = arith.constant 0 : i32
    %c0_i32_1 = arith.constant 0 : i32
    return %c0_i32, %c0_i32_0 : i32, i32
  }
  func.func @transform_2(%arg0: i32) -> (i32, i32) {
    %c0_i32 = arith.constant 0 : i32
    %c0_i32_0 = arith.constant 0 : i32
    %c0_i32_1 = arith.constant 0 : i32
    return %c0_i32, %c0_i32_0 : i32, i32
  }
  func.func @transform_3(%arg0: i32) -> (i32, i32, i32) {
    %c0_i32 = arith.constant 0 : i32
    %c0_i32_0 = arith.constant 0 : i32
    %c0_i32_1 = arith.constant 0 : i32
    %c0_i32_2 = arith.constant 0 : i32
    return %c0_i32, %c0_i32_0, %c0_i32_1 : i32, i32, i32
  }
}

module attributes {stable_mosaic.version = 11 : i64} {
  func.func @_layer_kernel(%arg0: i32, %arg1: i32, %arg2: memref<2x8x32xf32, #tpu.memory_space<vmem>>, %arg3: memref<32x32xf32, #tpu.memory_space<vmem>>, %arg4: memref<1x1x32xf32, #tpu.memory_space<vmem>>, %arg5: memref<1x1x32xf32, #tpu.memory_space<vmem>>, %arg6: memref<1x32x96xbf16, #tpu.memory_space<vmem>>, %arg7: memref<1x1x96xf32, #tpu.memory_space<vmem>>, %arg8: memref<1x32x32xbf16, #tpu.memory_space<vmem>>, %arg9: memref<1x1x32xf32, #tpu.memory_space<vmem>>, %arg10: memref<1x1x32xf32, #tpu.memory_space<vmem>>, %arg11: memref<1x1x32xf32, #tpu.memory_space<vmem>>, %arg12: memref<1x32x128xbf16, #tpu.memory_space<vmem>>, %arg13: memref<1x1x128xf32, #tpu.memory_space<vmem>>, %arg14: memref<1x128x32xbf16, #tpu.memory_space<vmem>>, %arg15: memref<1x1x32xf32, #tpu.memory_space<vmem>>, %arg16: memref<2x8x32xf32, #tpu.memory_space<vmem>>) attributes {dimension_semantics = [#tpu.dimension_semantics<parallel>, #tpu.dimension_semantics<arbitrary>], iteration_bounds = array<i64: 1, 2>, scalar_prefetch = 0 : i64, scratch_operands = 0 : i64, tpu.core_type = #tpu.core_type<tc>, window_params = [{transform_indices = @transform_0, window_bounds = array<i64: 2, 8, 32>}, {pipeline_mode = #tpu.pipeline_mode<synchronous>, transform_indices = @transform_1, window_bounds = array<i64: 32, 32>}, {transform_indices = @transform_2, window_bounds = array<i64: 1, 1, 32>}, {transform_indices = @transform_3, window_bounds = array<i64: 1, 1, 32>}, {transform_indices = @transform_4, window_bounds = array<i64: 1, 32, 96>}, {transform_indices = @transform_5, window_bounds = array<i64: 1, 1, 96>}, {transform_indices = @transform_6, window_bounds = array<i64: 1, 32, 32>}, {transform_indices = @transform_7, window_bounds = array<i64: 1, 1, 32>}, {transform_indices = @transform_8, window_bounds = array<i64: 1, 1, 32>}, {transform_indices = @transform_9, window_bounds = array<i64: 1, 1, 32>}, {transform_indices = @transform_10, window_bounds = array<i64: 1, 32, 128>}, {transform_indices = @transform_11, window_bounds = array<i64: 1, 1, 128>}, {transform_indices = @transform_12, window_bounds = array<i64: 1, 128, 32>}, {transform_indices = @transform_13, window_bounds = array<i64: 1, 1, 32>}, {transform_indices = @transform_14, window_bounds = array<i64: 2, 8, 32>}]} {
    %c0_i32 = arith.constant 0 : i32
    %0 = arith.cmpi eq, %arg1, %c0_i32 : i32
    %1 = arith.extui %0 : i1 to i32
    %c0_i32_0 = arith.constant 0 : i32
    %2 = arith.cmpi ne, %1, %c0_i32_0 : i32
    scf.if %2 {
      %c0_69 = arith.constant 0 : index
      %c0_70 = arith.constant 0 : index
      %c0_71 = arith.constant 0 : index
      %134 = vector.load %arg2[%c0_69, %c0_70, %c0_71] : memref<2x8x32xf32, #tpu.memory_space<vmem>>, vector<2x8x32xf32>
      %c0_72 = arith.constant 0 : index
      %c0_73 = arith.constant 0 : index
      %c0_74 = arith.constant 0 : index
      %135 = vector.load %arg16[%c0_72, %c0_73, %c0_74] : memref<2x8x32xf32, #tpu.memory_space<vmem>>, vector<2x8x32xf32>
      tpu.vector_store %arg16[%c0_72, %c0_73, %c0_74], %134 {strides = array<i32>} : memref<2x8x32xf32, #tpu.memory_space<vmem>>, vector<2x8x32xf32>,
    } else {
    }
    %c0 = arith.constant 0 : index
    %c0_1 = arith.constant 0 : index
    %c0_2 = arith.constant 0 : index
    %3 = vector.load %arg16[%c0, %c0_1, %c0_2] : memref<2x8x32xf32, #tpu.memory_space<vmem>>, vector<2x8x32xf32>
    %4 = vector.shape_cast %3 : vector<2x8x32xf32> to vector<16x32xf32>
    %c0_3 = arith.constant 0 : index
    %c0_4 = arith.constant 0 : index
    %c0_5 = arith.constant 0 : index
    %5 = vector.load %arg4[%c0_3, %c0_4, %c0_5] : memref<1x1x32xf32, #tpu.memory_space<vmem>>, vector<1x1x32xf32>
    %6 = vector.shape_cast %5 : vector<1x1x32xf32> to vector<1x32xf32>
    %c0_6 = arith.constant 0 : index
    %c0_7 = arith.constant 0 : index
    %c0_8 = arith.constant 0 : index
    %7 = vector.load %arg5[%c0_6, %c0_7, %c0_8] : memref<1x1x32xf32, #tpu.memory_space<vmem>>, vector<1x1x32xf32>
    %8 = vector.shape_cast %7 : vector<1x1x32xf32> to vector<1x32xf32>
    %cst = arith.constant dense<0.000000e+00> : vector<16xf32>
    %9 = vector.multi_reduction <add>, %4, %cst [1] : vector<16x32xf32> to vector<16xf32>
    %10 = vector.shape_cast %9 : vector<16xf32> to vector<16x1xf32>
    %cst_9 = arith.constant 3.200000e+01 : f32
    %11 = vector.broadcast %cst_9 : f32 to vector<16x1xf32>
    %12 = arith.divf %10, %11 : vector<16x1xf32>
    %13 = vector.broadcast %12 : vector<16x1xf32> to vector<16x32xf32>
    %14 = arith.subf %4, %13 : vector<16x32xf32>
    %15 = arith.mulf %14, %14 : vector<16x32xf32>
    %cst_10 = arith.constant dense<0.000000e+00> : vector<16xf32>
    %16 = vector.multi_reduction <add>, %15, %cst_10 [1] : vector<16x32xf32> to vector<16xf32>
    %17 = vector.shape_cast %16 : vector<16xf32> to vector<16x1xf32>
    %cst_11 = arith.constant 3.200000e+01 : f32
    %18 = vector.broadcast %cst_11 : f32 to vector<16x1xf32>
    %19 = arith.divf %17, %18 : vector<16x1xf32>
    %20 = vector.broadcast %12 : vector<16x1xf32> to vector<16x32xf32>
    %21 = arith.subf %4, %20 : vector<16x32xf32>
    %cst_12 = arith.constant 9.99999974E-6 : f32
    %22 = vector.broadcast %cst_12 : f32 to vector<16x1xf32>
    %23 = arith.addf %19, %22 : vector<16x1xf32>
    %24 = math.rsqrt %23 : vector<16x1xf32>
    %25 = vector.broadcast %24 : vector<16x1xf32> to vector<16x32xf32>
    %26 = arith.mulf %21, %25 : vector<16x32xf32>
    %27 = vector.broadcast %6 : vector<1x32xf32> to vector<16x32xf32>
    %28 = arith.mulf %26, %27 : vector<16x32xf32>
    %29 = vector.broadcast %8 : vector<1x32xf32> to vector<16x32xf32>
    %30 = arith.addf %28, %29 : vector<16x32xf32>
    %31 = arith.truncf %30 : vector<16x32xf32> to vector<16x32xbf16>
    %c0_13 = arith.constant 0 : index
    %c0_14 = arith.constant 0 : index
    %c0_15 = arith.constant 0 : index
    %32 = vector.load %arg6[%c0_13, %c0_14, %c0_15] : memref<1x32x96xbf16, #tpu.memory_space<vmem>>, vector<1x32x96xbf16>
    %33 = vector.shape_cast %32 : vector<1x32x96xbf16> to vector<32x96xbf16>
    %cst_16 = arith.constant dense<0.000000e+00> : vector<16x96xf32>
    %34 = tpu.matmul %31, %33, %cst_16 {dimension_numbers = #tpu.dot_dimension_numbers<[1], [0], [0], [1], [0, 0, 1, 1], [], []>} : vector<16x32xbf16>, vector<32x96xbf16>, vector<16x96xf32> -> vector<16x96xf32>
    %c0_17 = arith.constant 0 : index
    %c0_18 = arith.constant 0 : index
    %c0_19 = arith.constant 0 : index
    %35 = vector.load %arg7[%c0_17, %c0_18, %c0_19] : memref<1x1x96xf32, #tpu.memory_space<vmem>>, vector<1x1x96xf32>
    %36 = vector.shape_cast %35 : vector<1x1x96xf32> to vector<1x96xf32>
    %37 = vector.broadcast %36 : vector<1x96xf32> to vector<16x96xf32>
    %38 = arith.addf %34, %37 : vector<16x96xf32>
    %39 = vector.extract_strided_slice %38 {offsets = [0, 0], sizes = [16, 32], strides = [1, 1]} : vector<16x96xf32> to vector<16x32xf32>
    %cst_20 = arith.constant 0.000000e+00 : f32
    %40 = vector.broadcast %cst_20 : f32 to vector<16x32xf32>
    %41 = arith.cmpf ogt, %39, %40 : vector<16x32xf32>
    %cst_21 = arith.constant 1.000000e+00 : f32
    %42 = vector.broadcast %cst_21 : f32 to vector<16x32xf32>
    %43 = arith.addf %39, %42 : vector<16x32xf32>
    %cst_22 = arith.constant 0.000000e+00 : f32
    %44 = vector.broadcast %cst_22 : f32 to vector<16x32xf32>
    %45 = arith.minimumf %39, %44 : vector<16x32xf32>
    %46 = math.exp %45 : vector<16x32xf32>
    %47 = arith.select %41, %43, %46 : vector<16x32xi1>, vector<16x32xf32>
    %48 = vector.shape_cast %47 : vector<16x32xf32> to vector<2x8x32xf32>
    %49 = vector.extract_strided_slice %38 {offsets = [0, 32], sizes = [16, 32], strides = [1, 1]} : vector<16x96xf32> to vector<16x32xf32>
    %cst_23 = arith.constant 0.000000e+00 : f32
    %50 = vector.broadcast %cst_23 : f32 to vector<16x32xf32>
    %51 = arith.cmpf ogt, %49, %50 : vector<16x32xf32>
    %cst_24 = arith.constant 1.000000e+00 : f32
    %52 = vector.broadcast %cst_24 : f32 to vector<16x32xf32>
    %53 = arith.addf %49, %52 : vector<16x32xf32>
    %cst_25 = arith.constant 0.000000e+00 : f32
    %54 = vector.broadcast %cst_25 : f32 to vector<16x32xf32>
    %55 = arith.minimumf %49, %54 : vector<16x32xf32>
    %56 = math.exp %55 : vector<16x32xf32>
    %57 = arith.select %51, %53, %56 : vector<16x32xi1>, vector<16x32xf32>
    %58 = vector.shape_cast %57 : vector<16x32xf32> to vector<2x8x32xf32>
    %59 = vector.extract_strided_slice %38 {offsets = [0, 64], sizes = [16, 32], strides = [1, 1]} : vector<16x96xf32> to vector<16x32xf32>
    %60 = vector.shape_cast %59 : vector<16x32xf32> to vector<2x8x32xf32>
    %c0_26 = arith.constant 0 : index
    %c0_27 = arith.constant 0 : index
    %61 = vector.load %arg3[%c0_26, %c0_27] : memref<32x32xf32, #tpu.memory_space<vmem>>, vector<32x32xf32>
    "tpu.trace_start"() <{level = 10 : i32, message = "btd,bte->bde"}> : () -> ()
    %cst_28 = arith.constant dense<0.000000e+00> : vector<2x32x32xf32>
    %62 = tpu.matmul %58, %60, %cst_28 {dimension_numbers = #tpu.dot_dimension_numbers<[1], [1], [2], [2], [0, 0, 0, 2, 1, 2], [0], [0]>} : vector<2x8x32xf32>, vector<2x8x32xf32>, vector<2x32x32xf32> -> vector<2x32x32xf32>
    "tpu.trace_stop"() : () -> ()
    %63 = vector.shape_cast %61 : vector<32x32xf32> to vector<1x32x32xf32>
    %64 = vector.broadcast %63 : vector<1x32x32xf32> to vector<2x32x32xf32>
    %65 = arith.mulf %62, %64 : vector<2x32x32xf32>
    "tpu.trace_start"() <{level = 10 : i32, message = "btd,bde->bte"}> : () -> ()
    %cst_29 = arith.constant dense<0.000000e+00> : vector<2x8x32xf32>
    %66 = tpu.matmul %48, %65, %cst_29 {dimension_numbers = #tpu.dot_dimension_numbers<[2], [1], [1], [2], [0, 0, 0, 1, 1, 2], [0], [0]>} : vector<2x8x32xf32>, vector<2x32x32xf32>, vector<2x8x32xf32> -> vector<2x8x32xf32>
    "tpu.trace_stop"() : () -> ()
    %cst_30 = arith.constant dense<0.000000e+00> : vector<2x32xf32>
    %67 = vector.multi_reduction <add>, %58, %cst_30 [1] : vector<2x8x32xf32> to vector<2x32xf32>
    %68 = vector.shape_cast %67 : vector<2x32xf32> to vector<2x1x32xf32>
    %69 = vector.broadcast %68 : vector<2x1x32xf32> to vector<2x8x32xf32>
    %70 = arith.mulf %48, %69 : vector<2x8x32xf32>
    %71 = vector.shape_cast %70 : vector<2x8x32xf32> to vector<16x32xf32>
    %cst_31 = arith.constant dense<0.000000e+00> : vector<16x32xf32>
    %72 = tpu.matmul %71, %61, %cst_31 {dimension_numbers = #tpu.dot_dimension_numbers<[1], [0], [0], [1], [0, 0, 1, 1], [], []>} : vector<16x32xf32>, vector<32x32xf32>, vector<16x32xf32> -> vector<16x32xf32>
    %73 = vector.shape_cast %66 : vector<2x8x32xf32> to vector<16x32xf32>
    %cst_32 = arith.constant 9.99999997E-7 : f32
    %74 = vector.broadcast %cst_32 : f32 to vector<16x32xf32>
    %75 = arith.addf %72, %74 : vector<16x32xf32>
    %76 = tpu.reciprocal %75 {approx = true} : vector<16x32xf32> -> vector<16x32xf32>
    %77 = arith.mulf %73, %76 : vector<16x32xf32>
    %78 = arith.truncf %77 : vector<16x32xf32> to vector<16x32xbf16>
    %c0_33 = arith.constant 0 : index
    %c0_34 = arith.constant 0 : index
    %c0_35 = arith.constant 0 : index
    %79 = vector.load %arg8[%c0_33, %c0_34, %c0_35] : memref<1x32x32xbf16, #tpu.memory_space<vmem>>, vector<1x32x32xbf16>
    %80 = vector.shape_cast %79 : vector<1x32x32xbf16> to vector<32x32xbf16>
    %cst_36 = arith.constant dense<0.000000e+00> : vector<16x32xf32>
    %81 = tpu.matmul %78, %80, %cst_36 {dimension_numbers = #tpu.dot_dimension_numbers<[1], [0], [0], [1], [0, 0, 1, 1], [], []>} : vector<16x32xbf16>, vector<32x32xbf16>, vector<16x32xf32> -> vector<16x32xf32>
    %c0_37 = arith.constant 0 : index
    %c0_38 = arith.constant 0 : index
    %c0_39 = arith.constant 0 : index
    %82 = vector.load %arg9[%c0_37, %c0_38, %c0_39] : memref<1x1x32xf32, #tpu.memory_space<vmem>>, vector<1x1x32xf32>
    %83 = vector.shape_cast %82 : vector<1x1x32xf32> to vector<1x32xf32>
    %84 = vector.broadcast %83 : vector<1x32xf32> to vector<16x32xf32>
    %85 = arith.addf %81, %84 : vector<16x32xf32>
    %86 = arith.addf %4, %85 : vector<16x32xf32>
    %c0_40 = arith.constant 0 : index
    %c0_41 = arith.constant 0 : index
    %c0_42 = arith.constant 0 : index
    %87 = vector.load %arg10[%c0_40, %c0_41, %c0_42] : memref<1x1x32xf32, #tpu.memory_space<vmem>>, vector<1x1x32xf32>
    %88 = vector.shape_cast %87 : vector<1x1x32xf32> to vector<1x32xf32>
    %c0_43 = arith.constant 0 : index
    %c0_44 = arith.constant 0 : index
    %c0_45 = arith.constant 0 : index
    %89 = vector.load %arg11[%c0_43, %c0_44, %c0_45] : memref<1x1x32xf32, #tpu.memory_space<vmem>>, vector<1x1x32xf32>
    %90 = vector.shape_cast %89 : vector<1x1x32xf32> to vector<1x32xf32>
    %cst_46 = arith.constant dense<0.000000e+00> : vector<16xf32>
    %91 = vector.multi_reduction <add>, %86, %cst_46 [1] : vector<16x32xf32> to vector<16xf32>
    %92 = vector.shape_cast %91 : vector<16xf32> to vector<16x1xf32>
    %cst_47 = arith.constant 3.200000e+01 : f32
    %93 = vector.broadcast %cst_47 : f32 to vector<16x1xf32>
    %94 = arith.divf %92, %93 : vector<16x1xf32>
    %95 = vector.broadcast %94 : vector<16x1xf32> to vector<16x32xf32>
    %96 = arith.subf %86, %95 : vector<16x32xf32>
    %97 = arith.mulf %96, %96 : vector<16x32xf32>
    %cst_48 = arith.constant dense<0.000000e+00> : vector<16xf32>
    %98 = vector.multi_reduction <add>, %97, %cst_48 [1] : vector<16x32xf32> to vector<16xf32>
    %99 = vector.shape_cast %98 : vector<16xf32> to vector<16x1xf32>
    %cst_49 = arith.constant 3.200000e+01 : f32
    %100 = vector.broadcast %cst_49 : f32 to vector<16x1xf32>
    %101 = arith.divf %99, %100 : vector<16x1xf32>
    %102 = vector.broadcast %94 : vector<16x1xf32> to vector<16x32xf32>
    %103 = arith.subf %86, %102 : vector<16x32xf32>
    %cst_50 = arith.constant 9.99999974E-6 : f32
    %104 = vector.broadcast %cst_50 : f32 to vector<16x1xf32>
    %105 = arith.addf %101, %104 : vector<16x1xf32>
    %106 = math.rsqrt %105 : vector<16x1xf32>
    %107 = vector.broadcast %106 : vector<16x1xf32> to vector<16x32xf32>
    %108 = arith.mulf %103, %107 : vector<16x32xf32>
    %109 = vector.broadcast %88 : vector<1x32xf32> to vector<16x32xf32>
    %110 = arith.mulf %108, %109 : vector<16x32xf32>
    %111 = vector.broadcast %90 : vector<1x32xf32> to vector<16x32xf32>
    %112 = arith.addf %110, %111 : vector<16x32xf32>
    %113 = arith.truncf %112 : vector<16x32xf32> to vector<16x32xbf16>
    %c0_51 = arith.constant 0 : index
    %c0_52 = arith.constant 0 : index
    %c0_53 = arith.constant 0 : index
    %114 = vector.load %arg12[%c0_51, %c0_52, %c0_53] : memref<1x32x128xbf16, #tpu.memory_space<vmem>>, vector<1x32x128xbf16>
    %115 = vector.shape_cast %114 : vector<1x32x128xbf16> to vector<32x128xbf16>
    %cst_54 = arith.constant dense<0.000000e+00> : vector<16x128xf32>
    %116 = tpu.matmul %113, %115, %cst_54 {dimension_numbers = #tpu.dot_dimension_numbers<[1], [0], [0], [1], [0, 0, 1, 1], [], []>} : vector<16x32xbf16>, vector<32x128xbf16>, vector<16x128xf32> -> vector<16x128xf32>
    %c0_55 = arith.constant 0 : index
    %c0_56 = arith.constant 0 : index
    %c0_57 = arith.constant 0 : index
    %117 = vector.load %arg13[%c0_55, %c0_56, %c0_57] : memref<1x1x128xf32, #tpu.memory_space<vmem>>, vector<1x1x128xf32>
    %118 = vector.shape_cast %117 : vector<1x1x128xf32> to vector<1x128xf32>
    %119 = vector.broadcast %118 : vector<1x128xf32> to vector<16x128xf32>
    %120 = arith.addf %116, %119 : vector<16x128xf32>
    %cst_58 = arith.constant 0.000000e+00 : f32
    %121 = vector.broadcast %cst_58 : f32 to vector<16x128xf32>
    %122 = arith.maximumf %120, %121 : vector<16x128xf32>
    %123 = arith.truncf %122 : vector<16x128xf32> to vector<16x128xbf16>
    %c0_59 = arith.constant 0 : index
    %c0_60 = arith.constant 0 : index
    %c0_61 = arith.constant 0 : index
    %124 = vector.load %arg14[%c0_59, %c0_60, %c0_61] : memref<1x128x32xbf16, #tpu.memory_space<vmem>>, vector<1x128x32xbf16>
    %125 = vector.shape_cast %124 : vector<1x128x32xbf16> to vector<128x32xbf16>
    %cst_62 = arith.constant dense<0.000000e+00> : vector<16x32xf32>
    %126 = tpu.matmul %123, %125, %cst_62 {dimension_numbers = #tpu.dot_dimension_numbers<[1], [0], [0], [1], [0, 0, 1, 1], [], []>} : vector<16x128xbf16>, vector<128x32xbf16>, vector<16x32xf32> -> vector<16x32xf32>
    %c0_63 = arith.constant 0 : index
    %c0_64 = arith.constant 0 : index
    %c0_65 = arith.constant 0 : index
    %127 = vector.load %arg15[%c0_63, %c0_64, %c0_65] : memref<1x1x32xf32, #tpu.memory_space<vmem>>, vector<1x1x32xf32>
    %128 = vector.shape_cast %127 : vector<1x1x32xf32> to vector<1x32xf32>
    %129 = vector.broadcast %128 : vector<1x32xf32> to vector<16x32xf32>
    %130 = arith.addf %126, %129 : vector<16x32xf32>
    %131 = arith.addf %86, %130 : vector<16x32xf32>
    %132 = vector.shape_cast %131 : vector<16x32xf32> to vector<2x8x32xf32>
    %c0_66 = arith.constant 0 : index
    %c0_67 = arith.constant 0 : index
    %c0_68 = arith.constant 0 : index
    %133 = vector.load %arg16[%c0_66, %c0_67, %c0_68] : memref<2x8x32xf32, #tpu.memory_space<vmem>>, vector<2x8x32xf32>
    tpu.vector_store %arg16[%c0_66, %c0_67, %c0_68], %132 {strides = array<i32>} : memref<2x8x32xf32, #tpu.memory_space<vmem>>, vector<2x8x32xf32>,
    return
  }
  func.func @transform_0(%arg0: i32, %arg1: i32) -> (i32, i32, i32) {
    %c0_i32 = arith.constant 0 : i32
    %c0_i32_0 = arith.constant 0 : i32
    %c0_i32_1 = arith.constant 0 : i32
    return %arg0, %c0_i32, %c0_i32_0 : i32, i32, i32
  }
  func.func @transform_1(%arg0: i32, %arg1: i32) -> (i32, i32) {
    %c0_i32 = arith.constant 0 : i32
    %c0_i32_0 = arith.constant 0 : i32
    %c0_i32_1 = arith.constant 0 : i32
    return %c0_i32, %c0_i32_0 : i32, i32
  }
  func.func @transform_2(%arg0: i32, %arg1: i32) -> (i32, i32, i32) {
    %c0_i32 = arith.constant 0 : i32
    %c0_i32_0 = arith.constant 0 : i32
    %c0_i32_1 = arith.constant 0 : i32
    return %arg1, %c0_i32, %c0_i32_0 : i32, i32, i32
  }
  func.func @transform_3(%arg0: i32, %arg1: i32) -> (i32, i32, i32) {
    %c0_i32 = arith.constant 0 : i32
    %c0_i32_0 = arith.constant 0 : i32
    %c0_i32_1 = arith.constant 0 : i32
    return %arg1, %c0_i32, %c0_i32_0 : i32, i32, i32
  }
  func.func @transform_4(%arg0: i32, %arg1: i32) -> (i32, i32, i32) {
    %c0_i32 = arith.constant 0 : i32
    %c0_i32_0 = arith.constant 0 : i32
    %c0_i32_1 = arith.constant 0 : i32
    return %arg1, %c0_i32, %c0_i32_0 : i32, i32, i32
  }
  func.func @transform_5(%arg0: i32, %arg1: i32) -> (i32, i32, i32) {
    %c0_i32 = arith.constant 0 : i32
    %c0_i32_0 = arith.constant 0 : i32
    %c0_i32_1 = arith.constant 0 : i32
    return %arg1, %c0_i32, %c0_i32_0 : i32, i32, i32
  }
  func.func @transform_6(%arg0: i32, %arg1: i32) -> (i32, i32, i32) {
    %c0_i32 = arith.constant 0 : i32
    %c0_i32_0 = arith.constant 0 : i32
    %c0_i32_1 = arith.constant 0 : i32
    return %arg1, %c0_i32, %c0_i32_0 : i32, i32, i32
  }
  func.func @transform_7(%arg0: i32, %arg1: i32) -> (i32, i32, i32) {
    %c0_i32 = arith.constant 0 : i32
    %c0_i32_0 = arith.constant 0 : i32
    %c0_i32_1 = arith.constant 0 : i32
    return %arg1, %c0_i32, %c0_i32_0 : i32, i32, i32
  }
  func.func @transform_8(%arg0: i32, %arg1: i32) -> (i32, i32, i32) {
    %c0_i32 = arith.constant 0 : i32
    %c0_i32_0 = arith.constant 0 : i32
    %c0_i32_1 = arith.constant 0 : i32
    return %arg1, %c0_i32, %c0_i32_0 : i32, i32, i32
  }
  func.func @transform_9(%arg0: i32, %arg1: i32) -> (i32, i32, i32) {
    %c0_i32 = arith.constant 0 : i32
    %c0_i32_0 = arith.constant 0 : i32
    %c0_i32_1 = arith.constant 0 : i32
    return %arg1, %c0_i32, %c0_i32_0 : i32, i32, i32
  }
  func.func @transform_10(%arg0: i32, %arg1: i32) -> (i32, i32, i32) {
    %c0_i32 = arith.constant 0 : i32
    %c0_i32_0 = arith.constant 0 : i32
    %c0_i32_1 = arith.constant 0 : i32
    return %arg1, %c0_i32, %c0_i32_0 : i32, i32, i32
  }
  func.func @transform_11(%arg0: i32, %arg1: i32) -> (i32, i32, i32) {
    %c0_i32 = arith.constant 0 : i32
    %c0_i32_0 = arith.constant 0 : i32
    %c0_i32_1 = arith.constant 0 : i32
    return %arg1, %c0_i32, %c0_i32_0 : i32, i32, i32
  }
  func.func @transform_12(%arg0: i32, %arg1: i32) -> (i32, i32, i32) {
    %c0_i32 = arith.constant 0 : i32
    %c0_i32_0 = arith.constant 0 : i32
    %c0_i32_1 = arith.constant 0 : i32
    return %arg1, %c0_i32, %c0_i32_0 : i32, i32, i32
  }
  func.func @transform_13(%arg0: i32, %arg1: i32) -> (i32, i32, i32) {
    %c0_i32 = arith.constant 0 : i32
    %c0_i32_0 = arith.constant 0 : i32
    %c0_i32_1 = arith.constant 0 : i32
    return %arg1, %c0_i32, %c0_i32_0 : i32, i32, i32
  }
  func.func @transform_14(%arg0: i32, %arg1: i32) -> (i32, i32, i32) {
    %c0_i32 = arith.constant 0 : i32
    %c0_i32_0 = arith.constant 0 : i32
    %c0_i32_1 = arith.constant 0 : i32
    return %arg0, %c0_i32, %c0_i32_0 : i32, i32, i32
  }
}

</mosaic_0001>

<llo_original>
// kernel: lint_forward.3
$region0: #{lint_forward.3}
  #allocation0 [shape = 'u32[]', space=smem, size = 0x4, offset = 0x4, fixed_abs, tag = 'smem constant byte address 0x4 - core index']
  #allocation1 [shape = 'u32[144,128]{1,0:T(1,128)}', space=vmem, size = 0x12000, scoped, tag = 'internal scratch']
  %s0 = inlined_call_operand.vmem [shape: f32[2,8,16], index: 0, kind: input, shape index: {}]
  %s1 = inlined_call_operand.vmem [shape: bf16[16,32], index: 1, kind: input, shape index: {}]
  %s2 = inlined_call_operand.vmem [shape: f32[8,32], index: 2, kind: input, shape index: {}]
  %s3 = inlined_call_operand.vmem [shape: f32[2,8,32], index: 3, kind: output, shape index: {}]
  %s4 = sld [smem:[#allocation0]]
  $region22: #{lint_forward.3} parent=0
    _
  %s6 = ssub.s32 1, %s4
  %s7 = scalar_select 0, %s6, %s4
  // Predicated region
  $region2: #{lint_forward.3} parent=0 // pred_check
    _
  $region3: #{lint_forward.3} parent=0 // pred_check_branch
    %9 = sbr.rel (0) target = $region5
  $region4: #{lint_forward.3} parent=0 // pred_region
    _
  $region5: #{lint_forward.3} parent=0 // pred_fallthru
    _
  // Predicated region
  $region6: #{lint_forward.3} parent=0 // pred_check
    _
  $region7: #{lint_forward.3} parent=0 // pred_check_branch
    %11 = sbr.rel (0) target = $region9
  $region8: #{lint_forward.3} parent=0 // pred_region
    _
  $region9: #{lint_forward.3} parent=0 // pred_fallthru
    _
  // Predicated region
  $region10: #{lint_forward.3} parent=0 // pred_check
    _
  $region11: #{lint_forward.3} parent=0 // pred_check_branch
    %13 = sbr.rel (0) target = $region13
  $region12: #{lint_forward.3} parent=0 // pred_region
    _
  $region13: #{lint_forward.3} parent=0 // pred_fallthru
    _
  %v15 = vld [vmem:[%s0] sm:$0xff]
  %v16 = vld [vmem:[%s0 + $0x8] sm:$0xff]
  %v17 = vpack.c.bf16 %v15, %v15
  %v18 = vpack.c.bf16 %v16, %v16
  %v19 = vld [vmem:[%s1] sm:$0xf]
  %v20 = vld [vmem:[%s1 + $0x4] sm:$0xf]
  %v23 = vunpack.c.l.b16 %v17
  %v24 = vunpack.c.l.b16 %v18
  %v25 = vpack.c.b16 %v24, %v23
  %v28 = vunpack.c.l.b16 %v19
  %v29 = vunpack.c.l.b16 %v20
  %v30 = vpack.c.b16 %v29, %v28
  %vm32 = vcmask 130048
  %v34 = vsel %vm32, %v25, 0
  %36 = vmatprep.subr.bf16.mxu0 0
  %37 = vmatpush1.bf16.msra.mxu0 %v30
  %38 = vmatprep.subr.bf16.mxu0 0
  %39 = vmatpush1.bf16.msra.mxu0 0
  %40 = vmatprep.subr.bf16.mxu0 0
  %41 = vmatpush1.bf16.msra.mxu0 0
  %42 = vmatprep.subr.bf16.mxu0 0
  %43 = vmatpush1.bf16.msra.mxu0 0
  %44 = vmatprep.subr.bf16.mxu0 0
  %45 = vmatpush1.bf16.msra.mxu0 0
  %46 = vmatprep.subr.bf16.mxu0 0
  %47 = vmatpush1.bf16.msra.mxu0 0
  %48 = vmatprep.subr.bf16.mxu0 0
  %49 = vmatpush1.bf16.msra.mxu0 0
  %50 = vmatprep.subr.bf16.mxu0 0
  %51 = vmatpush1.bf16.msra.mxu0 0
  %52 = vmatprep.subr.bf16.mxu0 0
  %53 = vmatpush1.bf16.msra.mxu0 0
  %54 = vmatprep.subr.bf16.mxu0 0
  %55 = vmatpush1.bf16.msra.mxu0 0
  %56 = vmatprep.subr.bf16.mxu0 0
  %57 = vmatpush1.bf16.msra.mxu0 0
  %58 = vmatprep.subr.bf16.mxu0 0
  %59 = vmatpush1.bf16.msra.mxu0 0
  %60 = vmatprep.subr.bf16.mxu0 0
  %61 = vmatpush1.bf16.msra.mxu0 0
  %62 = vmatprep.subr.bf16.mxu0 0
  %63 = vmatpush1.bf16.msra.mxu0 0
  %64 = vmatprep.subr.bf16.mxu0 0
  %65 = vmatpush1.bf16.msra.mxu0 0
  %66 = vmatprep.subr.bf16.mxu0 0
  %67 = vmatpush1.bf16.msra.mxu0 0
  %68 = vmatprep.mubr.bf16.mxu0 0
  %69 = vmatmul.mubr.bf16.gmra.mrb[0].mxu0 %v34
  %v70 = vpop.f32.mrb[0].mxu0
  %v71 = vadd.f32 0.0, %v70
  %v72 = vpop.f32.mrb[0].mxu0
  %v73 = vpop.f32.mrb[0].mxu0
  %v74 = vadd.f32 0.0, %v73
  %v75 = vpop.f32.mrb[0].mxu0
  %76 = vdwg.mxu0
  %v77 = vmul.f32 %v71, 5.656854
  %v78 = vmul.f32 %v74, 5.656854
  %v79 = vld [vmem:[%s2] sm:$0xff]
  %v80 = vadd.f32 %v77, %v79
  %v81 = vadd.f32 %v78, %v79
  %vm82 = vcmask 261120
  %83 = vst.msk [vmem:[%s3] sm:$0xff] %vm82, %v80
  %84 = vst.msk [vmem:[%s3 + $0x8] sm:$0xff] %vm82, %v81
  // Predicated region
  $region14: #{lint_forward.3} parent=0 // pred_check
    _
  $region15: #{lint_forward.3} parent=0 // pred_check_branch
    %86 = sbr.rel (0) target = $region17
  $region16: #{lint_forward.3} parent=0 // pred_region
    _
  $region17: #{lint_forward.3} parent=0 // pred_fallthru
    _
  // Predicated region
  $region18: #{lint_forward.3} parent=0 // pred_check
    _
  $region19: #{lint_forward.3} parent=0 // pred_check_branch
    %88 = sbr.rel (0) target = $region21
  $region20: #{lint_forward.3} parent=0 // pred_region
    _
  $region21: #{lint_forward.3} parent=0 // pred_fallthru
    _

// kernel: lint_forward.5
$region0: #{lint_forward.5}
  #allocation0 [shape = 'u32[]', space=smem, size = 0x4, offset = 0x4, fixed_abs, tag = 'smem constant byte address 0x4 - core index']
  #allocation1 [shape = 'u32[144,128]{1,0:T(1,128)}', space=vmem, size = 0x12000, scoped, tag = 'internal scratch']
  %s0 = inlined_call_operand.vmem [shape: f32[2,8,32], index: 0, kind: input, shape index: {}]
  %s1 = inlined_call_operand.vmem [shape: f32[1,32], index: 1, kind: input, shape index: {}]
  %s2 = inlined_call_operand.vmem [shape: f32[1,32], index: 2, kind: input, shape index: {}]
  %s3 = inlined_call_operand.vmem [shape: bf16[32,32], index: 3, kind: input, shape index: {}]
  %s4 = inlined_call_operand.vmem [shape: f32[1,32], index: 4, kind: input, shape index: {}]
  %s5 = inlined_call_operand.vmem [shape: bf16[32,32], index: 5, kind: input, shape index: {}]
  %s6 = inlined_call_operand.vmem [shape: f32[1,32], index: 6, kind: input, shape index: {}]
  %s7 = inlined_call_operand.vmem [shape: bf16[32,3], index: 7, kind: input, shape index: {}]
  %s8 = inlined_call_operand.vmem [shape: f32[1,3], index: 8, kind: input, shape index: {}]
  %s9 = inlined_call_operand.hbm [shape: f32[2,3], index: 9, kind: output, shape index: {}]
  %s10 = sld [smem:[#allocation0]]
  $region46: #{lint_forward.5} parent=0
    _
  %s12 = ssub.s32 1, %s10
  %s13 = scalar_select 0, %s12, %s10
  $region1: #{lint_forward.5} parent=0
    #allocation2 [shape = 'u8[1024]{0}', space=vmem, size = 0x400, scoped, tag = 'output window, operand 0, single buffered']
    #allocation3 [shape = 's32[1]{0}', space=sflag, size = 0x4, scoped, tag = 'scoped memory for lint_forward.5']
    %14 = vsyncpa [#allocation3], 0
    // Predicated region
    $region2: #{lint_forward.5} parent=1 // pred_check
      _
    $region3: #{lint_forward.5} parent=1 // pred_check_branch
      %16 = sbr.rel (0) target = $region5
    $region4: #{lint_forward.5} parent=1 // pred_region
      _
    $region5: #{lint_forward.5} parent=1 // pred_fallthru
      _
    // Predicated region
    $region6: #{lint_forward.5} parent=1 // pred_check
      _
    $region7: #{lint_forward.5} parent=1 // pred_check_branch
      %18 = sbr.rel (0) target = $region9
    $region8: #{lint_forward.5} parent=1 // pred_region
      _
    $region9: #{lint_forward.5} parent=1 // pred_fallthru
      _
    // Predicated region
    $region10: #{lint_forward.5} parent=1 // pred_check
      _
    $region11: #{lint_forward.5} parent=1 // pred_check_branch
      %20 = sbr.rel (0) target = $region13
    $region12: #{lint_forward.5} parent=1 // pred_region
      _
    $region13: #{lint_forward.5} parent=1 // pred_fallthru
      _
    // Predicated region
    $region14: #{lint_forward.5} parent=1 // pred_check
      _
    $region15: #{lint_forward.5} parent=1 // pred_check_branch
      %22 = sbr.rel (0) target = $region17
    $region16: #{lint_forward.5} parent=1 // pred_region
      _
    $region17: #{lint_forward.5} parent=1 // pred_fallthru
      _
    // Predicated region
    $region18: #{lint_forward.5} parent=1 // pred_check
      _
    $region19: #{lint_forward.5} parent=1 // pred_check_branch
      %24 = sbr.rel (0) target = $region21
    $region20: #{lint_forward.5} parent=1 // pred_region
      _
    $region21: #{lint_forward.5} parent=1 // pred_fallthru
      _
    // Predicated region
    $region22: #{lint_forward.5} parent=1 // pred_check
      _
    $region23: #{lint_forward.5} parent=1 // pred_check_branch
      %26 = sbr.rel (0) target = $region25
    $region24: #{lint_forward.5} parent=1 // pred_region
      _
    $region25: #{lint_forward.5} parent=1 // pred_fallthru
      _
    // Predicated region
    $region26: #{lint_forward.5} parent=1 // pred_check
      _
    $region27: #{lint_forward.5} parent=1 // pred_check_branch
      %28 = sbr.rel (0) target = $region29
    $region28: #{lint_forward.5} parent=1 // pred_region
      _
    $region29: #{lint_forward.5} parent=1 // pred_fallthru
      _
    // Predicated region
    $region30: #{lint_forward.5} parent=1 // pred_check
      _
    $region31: #{lint_forward.5} parent=1 // pred_check_branch
      %30 = sbr.rel (0) target = $region33
    $region32: #{lint_forward.5} parent=1 // pred_region
      _
    $region33: #{lint_forward.5} parent=1 // pred_fallthru
      _
    // Predicated region
    $region34: #{lint_forward.5} parent=1 // pred_check
      _
    $region35: #{lint_forward.5} parent=1 // pred_check_branch
      %32 = sbr.rel (0) target = $region37
    $region36: #{lint_forward.5} parent=1 // pred_region
      _
    $region37: #{lint_forward.5} parent=1 // pred_fallthru
      _
    %v34 = vld [vmem:[%s0] sm:$0xff]
    %v35 = vld [vmem:[%s0 + $0x8] sm:$0xff]
    %v36 = vld [vmem:[%s1] sm:$0x1]
    %v37 = vld [vmem:[%s2] sm:$0x1]
    %vm38 = vcmask 261120
    %v39 = vsel %vm38, %v34, 0.0
    %40 = vadd.xlane.f32.xlu0 %v39
    %v41 = vpop.xlane.xlu0 %40
    %v42 = vsel %vm38, %v35, 0.0
    %43 = vadd.xlane.f32.xlu0 %v42
    %v44 = vpop.xlane.xlu0 %43
    %v45 = vrcp.pop 32.0
    %v46 = vmul.f32 %v41, %v45
    %v47 = vmul.f32 %v44, %v45
    %v48 = vsub.f32 %v34, %v46
    %v49 = vsub.f32 %v35, %v47
    %v50 = vmul.f32 %v48, %v48
    %v51 = vmul.f32 %v49, %v49
    %v52 = vsel %vm38, %v50, 0.0
    %53 = vadd.xlane.f32.xlu0 %v52
    %v54 = vpop.xlane.xlu0 %53
    %v55 = vsel %vm38, %v51, 0.0
    %56 = vadd.xlane.f32.xlu0 %v55
    %v57 = vpop.xlane.xlu0 %56
    %v58 = vmul.f32 %v54, %v45
    %v59 = vmul.f32 %v57, %v45
    %v60 = vadd.f32 %v58, 1e-05
    %v61 = vadd.f32 %v59, 1e-05
    %v62 = vrsqrt.pop %v60
    %v63 = vrsqrt.pop %v61
    %v64 = vmul.f32 %v48, %v62
    %v65 = vmul.f32 %v49, %v63
    %v67 = vlaneseq
    %v68 = vshrl.u32 %v67, 7
    %v69 = vsub.s32 0, %v68
    %v70 = vrot.slane %v36, %v69
    %v72 = vmul.f32 %v64, %v70
    %v73 = vmul.f32 %v65, %v70
    %v75 = vlaneseq
    %v76 = vshrl.u32 %v75, 7
    %v77 = vsub.s32 0, %v76
    %v78 = vrot.slane %v37, %v77
    %v80 = vadd.f32 %v72, %v78
    %v81 = vadd.f32 %v73, %v78
    %v82 = vpack.c.bf16 %v81, %v80
    %v83 = vld [vmem:[%s3] sm:$0xf]
    %v84 = vld [vmem:[%s3 + $0x4] sm:$0xf]
    %v85 = vld [vmem:[%s3 + $0x8] sm:$0xf]
    %v86 = vld [vmem:[%s3 + $0xc] sm:$0xf]
    %v87 = vld [vmem:[%s4] sm:$0x1]
    %v89 = vlaneseq
    %v90 = vshrl.u32 %v89, 7
    %v91 = vsub.s32 0, %v90
    %v92 = vrot.slane %v87, %v91
    %v98 = vunpack.c.l.b16 %v83
    %v99 = vunpack.c.l.b16 %v84
    %v100 = vunpack.c.l.b16 %v85
    %v101 = vunpack.c.l.b16 %v86
    %v102 = vpack.c.b16 %v99, %v98
    %v103 = vpack.c.b16 %v101, %v100
    %v107 = vsel %vm38, %v82, 0
    %109 = vmatprep.subr.bf16.mxu0 0
    %110 = vmatpush1.bf16.msra.mxu0 %v102
    %111 = vmatprep.subr.bf16.mxu0 0
    %112 = vmatpush1.bf16.msra.mxu0 %v103
    %113 = vmatprep.subr.bf16.mxu0 0
    %114 = vmatpush1.bf16.msra.mxu0 0
    %115 = vmatprep.subr.bf16.mxu0 0
    %116 = vmatpush1.bf16.msra.mxu0 0
    %117 = vmatprep.subr.bf16.mxu0 0
    %118 = vmatpush1.bf16.msra.mxu0 0
    %119 = vmatprep.subr.bf16.mxu0 0
    %120 = vmatpush1.bf16.msra.mxu0 0
    %121 = vmatprep.subr.bf16.mxu0 0
    %122 = vmatpush1.bf16.msra.mxu0 0
    %123 = vmatprep.subr.bf16.mxu0 0
    %124 = vmatpush1.bf16.msra.mxu0 0
    %125 = vmatprep.subr.bf16.mxu0 0
    %126 = vmatpush1.bf16.msra.mxu0 0
    %127 = vmatprep.subr.bf16.mxu0 0
    %128 = vmatpush1.bf16.msra.mxu0 0
    %129 = vmatprep.subr.bf16.mxu0 0
    %130 = vmatpush1.bf16.msra.mxu0 0
    %131 = vmatprep.subr.bf16.mxu0 0
    %132 = vmatpush1.bf16.msra.mxu0 0
    %133 = vmatprep.subr.bf16.mxu0 0
    %134 = vmatpush1.bf16.msra.mxu0 0
    %135 = vmatprep.subr.bf16.mxu0 0
    %136 = vmatpush1.bf16.msra.mxu0 0
    %137 = vmatprep.subr.bf16.mxu0 0
    %138 = vmatpush1.bf16.msra.mxu0 0
    %139 = vmatprep.subr.bf16.mxu0 0
    %140 = vmatpush1.bf16.msra.mxu0 0
    %141 = vmatprep.mubr.bf16.mxu0 0
    %142 = vmatmul.mubr.bf16.gmra.mrb[0].mxu0 %v107
    %v143 = vpop.f32.mrb[0].mxu0
    %v144 = vadd.f32 %v92, %v143
    %v145 = vpop.f32.mrb[0].mxu0
    %v146 = vpop.f32.mrb[0].mxu0
    %v147 = vadd.f32 %v92, %v146
    %v148 = vpop.f32.mrb[0].mxu0
    %149 = vdwg.mxu0
    %v150 = vmax.f32 %v144, 0.0
    %v151 = vmax.f32 %v147, 0.0
    %v152 = vpack.c.bf16 %v151, %v150
    %v153 = vld [vmem:[%s5] sm:$0xf]
    %v154 = vld [vmem:[%s5 + $0x4] sm:$0xf]
    %v155 = vld [vmem:[%s5 + $0x8] sm:$0xf]
    %v156 = vld [vmem:[%s5 + $0xc] sm:$0xf]
    %v157 = vld [vmem:[%s6] sm:$0x1]
    %v159 = vlaneseq
    %v160 = vshrl.u32 %v159, 7
    %v161 = vsub.s32 0, %v160
    %v162 = vrot.slane %v157, %v161
    %v168 = vunpack.c.l.b16 %v153
    %v169 = vunpack.c.l.b16 %v154
    %v170 = vunpack.c.l.b16 %v155
    %v171 = vunpack.c.l.b16 %v156
    %v172 = vpack.c.b16 %v169, %v168
    %v173 = vpack.c.b16 %v171, %v170
    %v177 = vsel %vm38, %v152, 0
    %179 = vmatprep.subr.bf16.mxu0 0
    %180 = vmatpush1.bf16.msra.mxu0 %v172
    %181 = vmatprep.subr.bf16.mxu0 0
    %182 = vmatpush1.bf16.msra.mxu0 %v173
    %183 = vmatprep.subr.bf16.mxu0 0
    %184 = vmatpush1.bf16.msra.mxu0 0
    %185 = vmatprep.subr.bf16.mxu0 0
    %186 = vmatpush1.bf16.msra.mxu0 0
    %187 = vmatprep.subr.bf16.mxu0 0
    %188 = vmatpush1.bf16.msra.mxu0 0
    %189 = vmatprep.subr.bf16.mxu0 0
    %190 = vmatpush1.bf16.msra.mxu0 0
    %191 = vmatprep.subr.bf16.mxu0 0
    %192 = vmatpush1.bf16.msra.mxu0 0
    %193 = vmatprep.subr.bf16.mxu0 0
    %194 = vmatpush1.bf16.msra.mxu0 0
    %195 = vmatprep.subr.bf16.mxu0 0
    %196 = vmatpush1.bf16.msra.mxu0 0
    %197 = vmatprep.subr.bf16.mxu0 0
    %198 = vmatpush1.bf16.msra.mxu0 0
    %199 = vmatprep.subr.bf16.mxu0 0
    %200 = vmatpush1.bf16.msra.mxu0 0
    %201 = vmatprep.subr.bf16.mxu0 0
    %202 = vmatpush1.bf16.msra.mxu0 0
    %203 = vmatprep.subr.bf16.mxu0 0
    %204 = vmatpush1.bf16.msra.mxu0 0
    %205 = vmatprep.subr.bf16.mxu0 0
    %206 = vmatpush1.bf16.msra.mxu0 0
    %207 = vmatprep.subr.bf16.mxu0 0
    %208 = vmatpush1.bf16.msra.mxu0 0
    %209 = vmatprep.subr.bf16.mxu0 0
    %210 = vmatpush1.bf16.msra.mxu0 0
    %211 = vmatprep.mubr.bf16.mxu0 0
    %212 = vmatmul.mubr.bf16.gmra.mrb[0].mxu0 %v177
    %v213 = vpop.f32.mrb[0].mxu0
    %v214 = vadd.f32 %v162, %v213
    %v215 = vpop.f32.mrb[0].mxu0
    %v216 = vpop.f32.mrb[0].mxu0
    %v217 = vadd.f32 %v162, %v216
    %v218 = vpop.f32.mrb[0].mxu0
    %219 = vdwg.mxu0
    %v220 = vadd.f32 %v80, %v214
    %v221 = vadd.f32 %v81, %v217
    %v222 = vsel %vm38, %v220, 0.0
    %v223 = vrot.slane %v222, 4
    %v224 = vadd.f32 %v222, %v223
    %v225 = vrot.slane %v224, 2
    %v226 = vadd.f32 %v224, %v225
    %v227 = vrot.slane %v226, 1
    %v228 = vadd.f32 %v226, %v227
    %v229 = vsel %vm38, %v221, 0.0
    %v230 = vrot.slane %v229, 4
    %v231 = vadd.f32 %v229, %v230
    %v232 = vrot.slane %v231, 2
    %v233 = vadd.f32 %v231, %v232
    %v234 = vrot.slane %v233, 1
    %v235 = vadd.f32 %v233, %v234
    %v236 = vrcp.pop 8.0
    %v237 = vmul.f32 %v228, %v236
    %v238 = vmul.f32 %v235, %v236
    %v239 = vpack.c.bf16 %v237, %v237
    %v240 = vpack.c.bf16 %v238, %v238
    %v241 = vld [vmem:[%s7] sm:$0xf]
    %v242 = vld [vmem:[%s7 + $0x4] sm:$0xf]
    %v243 = vld [vmem:[%s7 + $0x8] sm:$0xf]
    %v244 = vld [vmem:[%s7 + $0xc] sm:$0xf]
    %v245 = vld [vmem:[%s8] sm:$0x1]
    %v247 = vlaneseq
    %v248 = vshrl.u32 %v247, 7
    %v249 = vsub.s32 0, %v248
    %v250 = vrot.slane %v245, %v249
    %v254 = vunpack.c.l.b16 %v239
    %v255 = vunpack.c.l.b16 %v240
    %vm256 = vcmask 1041409
    %v257 = vsel %vm256, %v255, %v254
    %v258 = vpack.c.b16 %v257, %v257
    %v263 = vunpack.c.l.b16 %v241
    %v264 = vunpack.c.l.b16 %v242
    %v265 = vunpack.c.l.b16 %v243
    %v266 = vunpack.c.l.b16 %v244
    %v267 = vpack.c.b16 %v264, %v263
    %v268 = vpack.c.b16 %v266, %v265
    %v272 = vsel %vm38, %v258, 0
    %274 = vmatprep.subr.bf16.mxu0 0
    %275 = vmatpush1.bf16.msra.mxu0 %v267
    %276 = vmatprep.subr.bf16.mxu0 0
    %277 = vmatpush1.bf16.msra.mxu0 %v268
    %278 = vmatprep.subr.bf16.mxu0 0
    %279 = vmatpush1.bf16.msra.mxu0 0
    %280 = vmatprep.subr.bf16.mxu0 0
    %281 = vmatpush1.bf16.msra.mxu0 0
    %282 = vmatprep.subr.bf16.mxu0 0
    %283 = vmatpush1.bf16.msra.mxu0 0
    %284 = vmatprep.subr.bf16.mxu0 0
    %285 = vmatpush1.bf16.msra.mxu0 0
    %286 = vmatprep.subr.bf16.mxu0 0
    %287 = vmatpush1.bf16.msra.mxu0 0
    %288 = vmatprep.subr.bf16.mxu0 0
    %289 = vmatpush1.bf16.msra.mxu0 0
    %290 = vmatprep.subr.bf16.mxu0 0
    %291 = vmatpush1.bf16.msra.mxu0 0
    %292 = vmatprep.subr.bf16.mxu0 0
    %293 = vmatpush1.bf16.msra.mxu0 0
    %294 = vmatprep.subr.bf16.mxu0 0
    %295 = vmatpush1.bf16.msra.mxu0 0
    %296 = vmatprep.subr.bf16.mxu0 0
    %297 = vmatpush1.bf16.msra.mxu0 0
    %298 = vmatprep.subr.bf16.mxu0 0
    %299 = vmatpush1.bf16.msra.mxu0 0
    %300 = vmatprep.subr.bf16.mxu0 0
    %301 = vmatpush1.bf16.msra.mxu0 0
    %302 = vmatprep.subr.bf16.mxu0 0
    %303 = vmatpush1.bf16.msra.mxu0 0
    %304 = vmatprep.subr.bf16.mxu0 0
    %305 = vmatpush1.bf16.msra.mxu0 0
    %306 = vmatprep.mubr.bf16.mxu0 0
    %307 = vmatmul.mubr.bf16.gmra.mrb[0].mxu0 %v272
    %v308 = vpop.f32.mrb[0].mxu0
    %v309 = vadd.f32 %v250, %v308
    %v310 = vpop.f32.mrb[0].mxu0
    %v311 = vpop.f32.mrb[0].mxu0
    %v312 = vpop.f32.mrb[0].mxu0
    %313 = vdwg.mxu0
    %vm314 = vcmask 17408
    %315 = vst.msk [vmem:[#allocation2] sm:$0x3] %vm314, %v309
    // Predicated region
    $region38: #{lint_forward.5} parent=1 // pred_check
      _
    $region39: #{lint_forward.5} parent=1 // pred_check_branch
      %317 = sbr.rel (0) target = $region41
    $region40: #{lint_forward.5} parent=1 // pred_region
      %s319 = ssub.s32 32, 32
      %320 = vsyncadd [#allocation3], %s319
      %s322 = sshll.u32 [#allocation2], 4
      %s323 = int_to_ptr.vmem [resolvable:$true] %s322
      %325 = dma.vmem_to_hbm [thread:$0]  %s323, 32, %s9, [#allocation3]
    $region41: #{lint_forward.5} parent=1 // pred_fallthru
      _
    // Predicated region
    $region42: #{lint_forward.5} parent=1 // pred_check
      _
    $region43: #{lint_forward.5} parent=1 // pred_check_branch
      %327 = sbr.rel (0) target = $region45
    $region44: #{lint_forward.5} parent=1 // pred_region
      %328 = dma.done [#allocation3], 32
    $region45: #{lint_forward.5} parent=1 // pred_fallthru
      _
    %329 = vsyncpa [#allocation3], 1

// kernel: lint_forward.4
$region0: #{lint_forward.4}
  #allocation0 [shape = 'u32[]', space=smem, size = 0x4, offset = 0x4, fixed_abs, tag = 'smem constant byte address 0x4 - core index']
  #allocation1 [shape = 'u32[144,128]{1,0:T(1,128)}', space=vmem, size = 0x12000, scoped, tag = 'internal scratch']
  %s0 = inlined_call_operand.vmem [shape: f32[2,8,32], index: 0, kind: input, shape index: {}]
  %s1 = inlined_call_operand.vmem [shape: f32[32,32], index: 1, kind: input, shape index: {}]
  %s2 = inlined_call_operand.vmem [shape: f32[2,1,32], index: 2, kind: input, shape index: {}]
  %s3 = inlined_call_operand.vmem [shape: f32[2,1,32], index: 3, kind: input, shape index: {}]
  %s4 = inlined_call_operand.vmem [shape: bf16[2,32,96], index: 4, kind: input, shape index: {}]
  %s5 = inlined_call_operand.vmem [shape: f32[2,1,96], index: 5, kind: input, shape index: {}]
  %s6 = inlined_call_operand.vmem [shape: bf16[2,32,32], index: 6, kind: input, shape index: {}]
  %s7 = inlined_call_operand.vmem [shape: f32[2,1,32], index: 7, kind: input, shape index: {}]
  %s8 = inlined_call_operand.vmem [shape: f32[2,1,32], index: 8, kind: input, shape index: {}]
  %s9 = inlined_call_operand.vmem [shape: f32[2,1,32], index: 9, kind: input, shape index: {}]
  %s10 = inlined_call_operand.vmem [shape: bf16[2,32,128], index: 10, kind: input, shape index: {}]
  %s11 = inlined_call_operand.vmem [shape: f32[2,1,128], index: 11, kind: input, shape index: {}]
  %s12 = inlined_call_operand.vmem [shape: bf16[2,128,32], index: 12, kind: input, shape index: {}]
  %s13 = inlined_call_operand.vmem [shape: f32[2,1,32], index: 13, kind: input, shape index: {}]
  %s14 = inlined_call_operand.vmem [shape: f32[2,8,32], index: 14, kind: output, shape index: {}]
  %s15 = sld [smem:[#allocation0]]
  $region93: #{lint_forward.4} parent=0
    _
  %s17 = ssub.s32 1, %s15
  %s18 = scalar_select 0, %s17, %s15
  loop: start=0, step=1, limit=4
  $region2: #{lint_forward.4} parent=0 // loop_pre_header
    _
  $region3: #{lint_forward.4} parent=0 // loop_header
    %s20 = sphi 0, %s24
    %p21 = scmp.ge.s32.totalorder %s20, 4
    %s27 = sphi 0, %s39
    %s28 = sphi 0, %s35
    %s29 = sphi 0, %s27
    %s30 = sphi 0, %s28
    %s31 = sphi 0, %s29
    %s32 = sphi 0, %s30
    %s42 = sphi 0, %s44
    %s45 = sphi 0, %s42
    %s46 = sphi 0, %s45
    %s62 = sphi 0, %s46
    %s66 = sphi 0, %s66
    %s68 = sphi 0, %s66
    %s69 = sphi 0, %s68
    %s83 = sphi 0, %s69
    %s89 = sphi 0, %s91
    %s92 = sphi 0, %s89
    %s93 = sphi 0, %s92
    %s109 = sphi 0, %s93
    %s115 = sphi 0, %s117
    %s118 = sphi 0, %s115
    %s119 = sphi 0, %s118
    %s135 = sphi 0, %s119
    %s141 = sphi 0, %s143
    %s144 = sphi 0, %s141
    %s145 = sphi 0, %s144
    %s161 = sphi 0, %s145
    %s167 = sphi 0, %s169
    %s170 = sphi 0, %s167
    %s171 = sphi 0, %s170
    %s187 = sphi 0, %s171
    %s193 = sphi 0, %s195
    %s196 = sphi 0, %s193
    %s197 = sphi 0, %s196
    %s213 = sphi 0, %s197
    %s219 = sphi 0, %s221
    %s222 = sphi 0, %s219
    %s223 = sphi 0, %s222
    %s239 = sphi 0, %s223
    %s245 = sphi 0, %s247
    %s248 = sphi 0, %s245
    %s249 = sphi 0, %s248
    %s265 = sphi 0, %s249
    %s271 = sphi 0, %s273
    %s274 = sphi 0, %s271
    %s275 = sphi 0, %s274
    %s291 = sphi 0, %s275
    %s297 = sphi 0, %s299
    %s300 = sphi 0, %s297
    %s301 = sphi 0, %s300
    %s317 = sphi 0, %s301
    %s323 = sphi 0, %s325
    %s326 = sphi 0, %s323
    %s327 = sphi 0, %s326
    %s343 = sphi 0, %s327
    %s349 = sphi 0, %s351
    %s352 = sphi 0, %s349
    %s353 = sphi 0, %s352
    %s369 = sphi 0, %s353
    %s375 = sphi 0, %s377
    %s378 = sphi 0, %s375
    %s379 = sphi 0, %s378
    %s395 = sphi 0, %s379
    %s401 = sphi 0, %s403
    %s404 = sphi 0, %s401
    %s405 = sphi 0, %s404
    %s421 = sphi 0, %s405
  $region4: #{lint_forward.4} parent=0 // loop_header_branch
    %23 = sbr.rel (%p21) target = $region8
  $region5: #{lint_forward.4} parent=0 // loop_body
    %s25 = ssub.s32 %s20, 1
    %s26 = ssub.s32 %s20, 2
    %s33 = sadd.s32 1, %s28
    %p34 = scmp.ge.s32.totalorder %s33, 2
    %s35 = scalar_select %p34, 0, %s33
    %s36 = sadd.s32 1, %s27
    %s37 = scalar_select %p34, %s36, %s27
    %p38 = scmp.ge.s32.totalorder %s37, 1
    %s39 = scalar_select %p38, 0, %s37
    %s40 = ssub.s32 %s27, %s39
    %p41 = scmp.eq.s32.totalorder %s40, 0
    %s43 = sadd.s32 %s42, 1
    %s44 = scalar_select %p41, %s42, %s43
    %p47 = pneg %p41
    %p48 = scmp.eq.s32.totalorder %s20, 1
    %p49 = por %p47, %p48
    %p50 = scmp.ne.s32.totalorder %s42, %s45
    %p51 = scmp.eq.s32.totalorder %s20, 0
    %p52 = por %p50, %p51
    %p53 = scmp.ne.s32.totalorder %s42, %s45
    %p54 = scmp.eq.s32.totalorder %s25, 1
    %p55 = por %p53, %p54
    %p56 = scmp.ne.s32.totalorder %s45, %s46
    %p57 = scmp.eq.s32.totalorder %s25, 0
    %p58 = por %p56, %p57
    %p59 = scmp.ne.s32.totalorder %s45, %s46
    %p60 = scmp.eq.s32.totalorder %s26, 1
    %p61 = por %p59, %p60
    %p63 = scmp.ne.s32.totalorder %s46, %s62
    %p64 = scmp.eq.s32.totalorder %s26, 0
    %p65 = por %p63, %p64
    %s67 = sadd.s32 %s66, 1
    %p70 = scmp.eq.s32.totalorder %s20, 1
    %p71 = scmp.ne.s32.totalorder %s66, %s68
    %p72 = scmp.eq.s32.totalorder %s20, 0
    %p73 = por %p71, %p72
    %p74 = scmp.ne.s32.totalorder %s66, %s68
    %p75 = scmp.eq.s32.totalorder %s25, 1
    %p76 = por %p74, %p75
    %p77 = scmp.ne.s32.totalorder %s68, %s69
    %p78 = scmp.eq.s32.totalorder %s25, 0
    %p79 = por %p77, %p78
    %p80 = scmp.ne.s32.totalorder %s68, %s69
    %p81 = scmp.eq.s32.totalorder %s26, 1
    %p82 = por %p80, %p81
    %p84 = scmp.ne.s32.totalorder %s69, %s83
    %p85 = scmp.eq.s32.totalorder %s26, 0
    %p86 = por %p84, %p85
    %s87 = ssub.s32 %s28, %s35
    %p88 = scmp.eq.s32.totalorder %s87, 0
    %s90 = sadd.s32 %s89, 1
    %s91 = scalar_select %p88, %s89, %s90
    %p94 = pneg %p88
    %p95 = scmp.eq.s32.totalorder %s20, 1
    %p96 = por %p94, %p95
    %p97 = scmp.ne.s32.totalorder %s89, %s92
    %p98 = scmp.eq.s32.totalorder %s20, 0
    %p99 = por %p97, %p98
    %p100 = scmp.ne.s32.totalorder %s89, %s92
    %p101 = scmp.eq.s32.totalorder %s25, 1
    %p102 = por %p100, %p101
    %p103 = scmp.ne.s32.totalorder %s92, %s93
    %p104 = scmp.eq.s32.totalorder %s25, 0
    %p105 = por %p103, %p104
    %p106 = scmp.ne.s32.totalorder %s92, %s93
    %p107 = scmp.eq.s32.totalorder %s26, 1
    %p108 = por %p106, %p107
    %p110 = scmp.ne.s32.totalorder %s93, %s109
    %p111 = scmp.eq.s32.totalorder %s26, 0
    %p112 = por %p110, %p111
    %s113 = ssub.s32 %s28, %s35
    %p114 = scmp.eq.s32.totalorder %s113, 0
    %s116 = sadd.s32 %s115, 1
    %s117 = scalar_select %p114, %s115, %s116
    %p120 = pneg %p114
    %p121 = scmp.eq.s32.totalorder %s20, 1
    %p122 = por %p120, %p121
    %p123 = scmp.ne.s32.totalorder %s115, %s118
    %p124 = scmp.eq.s32.totalorder %s20, 0
    %p125 = por %p123, %p124
    %p126 = scmp.ne.s32.totalorder %s115, %s118
    %p127 = scmp.eq.s32.totalorder %s25, 1
    %p128 = por %p126, %p127
    %p129 = scmp.ne.s32.totalorder %s118, %s119
    %p130 = scmp.eq.s32.totalorder %s25, 0
    %p131 = por %p129, %p130
    %p132 = scmp.ne.s32.totalorder %s118, %s119
    %p133 = scmp.eq.s32.totalorder %s26, 1
    %p134 = por %p132, %p133
    %p136 = scmp.ne.s32.totalorder %s119, %s135
    %p137 = scmp.eq.s32.totalorder %s26, 0
    %p138 = por %p136, %p137
    %s139 = ssub.s32 %s28, %s35
    %p140 = scmp.eq.s32.totalorder %s139, 0
    %s142 = sadd.s32 %s141, 1
    %s143 = scalar_select %p140, %s141, %s142
    %p146 = pneg %p140
    %p147 = scmp.eq.s32.totalorder %s20, 1
    %p148 = por %p146, %p147
    %p149 = scmp.ne.s32.totalorder %s141, %s144
    %p150 = scmp.eq.s32.totalorder %s20, 0
    %p151 = por %p149, %p150
    %p152 = scmp.ne.s32.totalorder %s141, %s144
    %p153 = scmp.eq.s32.totalorder %s25, 1
    %p154 = por %p152, %p153
    %p155 = scmp.ne.s32.totalorder %s144, %s145
    %p156 = scmp.eq.s32.totalorder %s25, 0
    %p157 = por %p155, %p156
    %p158 = scmp.ne.s32.totalorder %s144, %s145
    %p159 = scmp.eq.s32.totalorder %s26, 1
    %p160 = por %p158, %p159
    %p162 = scmp.ne.s32.totalorder %s145, %s161
    %p163 = scmp.eq.s32.totalorder %s26, 0
    %p164 = por %p162, %p163
    %s165 = ssub.s32 %s28, %s35
    %p166 = scmp.eq.s32.totalorder %s165, 0
    %s168 = sadd.s32 %s167, 1
    %s169 = scalar_select %p166, %s167, %s168
    %p172 = pneg %p166
    %p173 = scmp.eq.s32.totalorder %s20, 1
    %p174 = por %p172, %p173
    %p175 = scmp.ne.s32.totalorder %s167, %s170
    %p176 = scmp.eq.s32.totalorder %s20, 0
    %p177 = por %p175, %p176
    %p178 = scmp.ne.s32.totalorder %s167, %s170
    %p179 = scmp.eq.s32.totalorder %s25, 1
    %p180 = por %p178, %p179
    %p181 = scmp.ne.s32.totalorder %s170, %s171
    %p182 = scmp.eq.s32.totalorder %s25, 0
    %p183 = por %p181, %p182
    %p184 = scmp.ne.s32.totalorder %s170, %s171
    %p185 = scmp.eq.s32.totalorder %s26, 1
    %p186 = por %p184, %p185
    %p188 = scmp.ne.s32.totalorder %s171, %s187
    %p189 = scmp.eq.s32.totalorder %s26, 0
    %p190 = por %p188, %p189
    %s191 = ssub.s32 %s28, %s35
    %p192 = scmp.eq.s32.totalorder %s191, 0
    %s194 = sadd.s32 %s193, 1
    %s195 = scalar_select %p192, %s193, %s194
    %p198 = pneg %p192
    %p199 = scmp.eq.s32.totalorder %s20, 1
    %p200 = por %p198, %p199
    %p201 = scmp.ne.s32.totalorder %s193, %s196
    %p202 = scmp.eq.s32.totalorder %s20, 0
    %p203 = por %p201, %p202
    %p204 = scmp.ne.s32.totalorder %s193, %s196
    %p205 = scmp.eq.s32.totalorder %s25, 1
    %p206 = por %p204, %p205
    %p207 = scmp.ne.s32.totalorder %s196, %s197
    %p208 = scmp.eq.s32.totalorder %s25, 0
    %p209 = por %p207, %p208
    %p210 = scmp.ne.s32.totalorder %s196, %s197
    %p211 = scmp.eq.s32.totalorder %s26, 1
    %p212 = por %p210, %p211
    %p214 = scmp.ne.s32.totalorder %s197, %s213
    %p215 = scmp.eq.s32.totalorder %s26, 0
    %p216 = por %p214, %p215
    %s217 = ssub.s32 %s28, %s35
    %p218 = scmp.eq.s32.totalorder %s217, 0
    %s220 = sadd.s32 %s219, 1
    %s221 = scalar_select %p218, %s219, %s220
    %p224 = pneg %p218
    %p225 = scmp.eq.s32.totalorder %s20, 1
    %p226 = por %p224, %p225
    %p227 = scmp.ne.s32.totalorder %s219, %s222
    %p228 = scmp.eq.s32.totalorder %s20, 0
    %p229 = por %p227, %p228
    %p230 = scmp.ne.s32.totalorder %s219, %s222
    %p231 = scmp.eq.s32.totalorder %s25, 1
    %p232 = por %p230, %p231
    %p233 = scmp.ne.s32.totalorder %s222, %s223
    %p234 = scmp.eq.s32.totalorder %s25, 0
    %p235 = por %p233, %p234
    %p236 = scmp.ne.s32.totalorder %s222, %s223
    %p237 = scmp.eq.s32.totalorder %s26, 1
    %p238 = por %p236, %p237
    %p240 = scmp.ne.s32.totalorder %s223, %s239
    %p241 = scmp.eq.s32.totalorder %s26, 0
    %p242 = por %p240, %p241
    %s243 = ssub.s32 %s28, %s35
    %p244 = scmp.eq.s32.totalorder %s243, 0
    %s246 = sadd.s32 %s245, 1
    %s247 = scalar_select %p244, %s245, %s246
    %p250 = pneg %p244
    %p251 = scmp.eq.s32.totalorder %s20, 1
    %p252 = por %p250, %p251
    %p253 = scmp.ne.s32.totalorder %s245, %s248
    %p254 = scmp.eq.s32.totalorder %s20, 0
    %p255 = por %p253, %p254
    %p256 = scmp.ne.s32.totalorder %s245, %s248
    %p257 = scmp.eq.s32.totalorder %s25, 1
    %p258 = por %p256, %p257
    %p259 = scmp.ne.s32.totalorder %s248, %s249
    %p260 = scmp.eq.s32.totalorder %s25, 0
    %p261 = por %p259, %p260
    %p262 = scmp.ne.s32.totalorder %s248, %s249
    %p263 = scmp.eq.s32.totalorder %s26, 1
    %p264 = por %p262, %p263
    %p266 = scmp.ne.s32.totalorder %s249, %s265
    %p267 = scmp.eq.s32.totalorder %s26, 0
    %p268 = por %p266, %p267
    %s269 = ssub.s32 %s28, %s35
    %p270 = scmp.eq.s32.totalorder %s269, 0
    %s272 = sadd.s32 %s271, 1
    %s273 = scalar_select %p270, %s271, %s272
    %p276 = pneg %p270
    %p277 = scmp.eq.s32.totalorder %s20, 1
    %p278 = por %p276, %p277
    %p279 = scmp.ne.s32.totalorder %s271, %s274
    %p280 = scmp.eq.s32.totalorder %s20, 0
    %p281 = por %p279, %p280
    %p282 = scmp.ne.s32.totalorder %s271, %s274
    %p283 = scmp.eq.s32.totalorder %s25, 1
    %p284 = por %p282, %p283
    %p285 = scmp.ne.s32.totalorder %s274, %s275
    %p286 = scmp.eq.s32.totalorder %s25, 0
    %p287 = por %p285, %p286
    %p288 = scmp.ne.s32.totalorder %s274, %s275
    %p289 = scmp.eq.s32.totalorder %s26, 1
    %p290 = por %p288, %p289
    %p292 = scmp.ne.s32.totalorder %s275, %s291
    %p293 = scmp.eq.s32.totalorder %s26, 0
    %p294 = por %p292, %p293
    %s295 = ssub.s32 %s28, %s35
    %p296 = scmp.eq.s32.totalorder %s295, 0
    %s298 = sadd.s32 %s297, 1
    %s299 = scalar_select %p296, %s297, %s298
    %p302 = pneg %p296
    %p303 = scmp.eq.s32.totalorder %s20, 1
    %p304 = por %p302, %p303
    %p305 = scmp.ne.s32.totalorder %s297, %s300
    %p306 = scmp.eq.s32.totalorder %s20, 0
    %p307 = por %p305, %p306
    %p308 = scmp.ne.s32.totalorder %s297, %s300
    %p309 = scmp.eq.s32.totalorder %s25, 1
    %p310 = por %p308, %p309
    %p311 = scmp.ne.s32.totalorder %s300, %s301
    %p312 = scmp.eq.s32.totalorder %s25, 0
    %p313 = por %p311, %p312
    %p314 = scmp.ne.s32.totalorder %s300, %s301
    %p315 = scmp.eq.s32.totalorder %s26, 1
    %p316 = por %p314, %p315
    %p318 = scmp.ne.s32.totalorder %s301, %s317
    %p319 = scmp.eq.s32.totalorder %s26, 0
    %p320 = por %p318, %p319
    %s321 = ssub.s32 %s28, %s35
    %p322 = scmp.eq.s32.totalorder %s321, 0
    %s324 = sadd.s32 %s323, 1
    %s325 = scalar_select %p322, %s323, %s324
    %p328 = pneg %p322
    %p329 = scmp.eq.s32.totalorder %s20, 1
    %p330 = por %p328, %p329
    %p331 = scmp.ne.s32.totalorder %s323, %s326
    %p332 = scmp.eq.s32.totalorder %s20, 0
    %p333 = por %p331, %p332
    %p334 = scmp.ne.s32.totalorder %s323, %s326
    %p335 = scmp.eq.s32.totalorder %s25, 1
    %p336 = por %p334, %p335
    %p337 = scmp.ne.s32.totalorder %s326, %s327
    %p338 = scmp.eq.s32.totalorder %s25, 0
    %p339 = por %p337, %p338
    %p340 = scmp.ne.s32.totalorder %s326, %s327
    %p341 = scmp.eq.s32.totalorder %s26, 1
    %p342 = por %p340, %p341
    %p344 = scmp.ne.s32.totalorder %s327, %s343
    %p345 = scmp.eq.s32.totalorder %s26, 0
    %p346 = por %p344, %p345
    %s347 = ssub.s32 %s28, %s35
    %p348 = scmp.eq.s32.totalorder %s347, 0
    %s350 = sadd.s32 %s349, 1
    %s351 = scalar_select %p348, %s349, %s350
    %p354 = pneg %p348
    %p355 = scmp.eq.s32.totalorder %s20, 1
    %p356 = por %p354, %p355
    %p357 = scmp.ne.s32.totalorder %s349, %s352
    %p358 = scmp.eq.s32.totalorder %s20, 0
    %p359 = por %p357, %p358
    %p360 = scmp.ne.s32.totalorder %s349, %s352
    %p361 = scmp.eq.s32.totalorder %s25, 1
    %p362 = por %p360, %p361
    %p363 = scmp.ne.s32.totalorder %s352, %s353
    %p364 = scmp.eq.s32.totalorder %s25, 0
    %p365 = por %p363, %p364
    %p366 = scmp.ne.s32.totalorder %s352, %s353
    %p367 = scmp.eq.s32.totalorder %s26, 1
    %p368 = por %p366, %p367
    %p370 = scmp.ne.s32.totalorder %s353, %s369
    %p371 = scmp.eq.s32.totalorder %s26, 0
    %p372 = por %p370, %p371
    %s373 = ssub.s32 %s28, %s35
    %p374 = scmp.eq.s32.totalorder %s373, 0
    %s376 = sadd.s32 %s375, 1
    %s377 = scalar_select %p374, %s375, %s376
    %p380 = pneg %p374
    %p381 = scmp.eq.s32.totalorder %s20, 1
    %p382 = por %p380, %p381
    %p383 = scmp.ne.s32.totalorder %s375, %s378
    %p384 = scmp.eq.s32.totalorder %s20, 0
    %p385 = por %p383, %p384
    %p386 = scmp.ne.s32.totalorder %s375, %s378
    %p387 = scmp.eq.s32.totalorder %s25, 1
    %p388 = por %p386, %p387
    %p389 = scmp.ne.s32.totalorder %s378, %s379
    %p390 = scmp.eq.s32.totalorder %s25, 0
    %p391 = por %p389, %p390
    %p392 = scmp.ne.s32.totalorder %s378, %s379
    %p393 = scmp.eq.s32.totalorder %s26, 1
    %p394 = por %p392, %p393
    %p396 = scmp.ne.s32.totalorder %s379, %s395
    %p397 = scmp.eq.s32.totalorder %s26, 0
    %p398 = por %p396, %p397
    %s399 = ssub.s32 %s27, %s39
    %p400 = scmp.eq.s32.totalorder %s399, 0
    %s402 = sadd.s32 %s401, 1
    %s403 = scalar_select %p400, %s401, %s402
    %p406 = pneg %p400
    %p407 = scmp.eq.s32.totalorder %s20, 1
    %p408 = por %p406, %p407
    %p409 = scmp.ne.s32.totalorder %s401, %s404
    %p410 = scmp.eq.s32.totalorder %s20, 0
    %p411 = por %p409, %p410
    %p412 = scmp.ne.s32.totalorder %s401, %s404
    %p413 = scmp.eq.s32.totalorder %s25, 1
    %p414 = por %p412, %p413
    %p415 = scmp.ne.s32.totalorder %s404, %s405
    %p416 = scmp.eq.s32.totalorder %s25, 0
    %p417 = por %p415, %p416
    %p418 = scmp.ne.s32.totalorder %s404, %s405
    %p419 = scmp.eq.s32.totalorder %s26, 1
    %p420 = por %p418, %p419
    %p422 = scmp.ne.s32.totalorder %s405, %s421
    %p423 = scmp.eq.s32.totalorder %s26, 0
    %p424 = por %p422, %p423
    %p425 = scmp.le.s32.totalorder 1, %s20
    %p426 = scmp.lt.s32.totalorder %s20, 3
    %p427 = pnand %p425, %p426
    %p428 = pneg %p427
    // Predicated region
    $region9: #{lint_forward.4} parent=5 // pred_check
      _
    $region10: #{lint_forward.4} parent=5 // pred_check_branch
      %430 = sbr.rel (%p427) target = $region12
    $region11: #{lint_forward.4} parent=5 // pred_region
      %s431 = ssub.s32 %s20, 1
      // Predicated region
      $region13: #{lint_forward.4} parent=11 // pred_check
        %p432 = pneg %p58
      $region14: #{lint_forward.4} parent=11 // pred_check_branch
        %434 = sbr.rel (%p432) target = $region16
      $region15: #{lint_forward.4} parent=11 // pred_region
        %s435 = smul.u32 2, %s29
        %p436 = scmp.lt.s32.totalorder %s435, 1
        %s437 = scalar_select %p436, %s435, 1
        %s438 = smul.addr %s437, 8
        %s439 = scalar_lea.vmem %s0, %s438
        %s440 = smul.u32 2, %s29
      $region16: #{lint_forward.4} parent=11 // pred_fallthru
        _
      // Predicated region
      $region17: #{lint_forward.4} parent=11 // pred_check
        %p441 = pneg %p79
      $region18: #{lint_forward.4} parent=11 // pred_check_branch
        %443 = sbr.rel (%p441) target = $region20
      $region19: #{lint_forward.4} parent=11 // pred_region
        _
      $region20: #{lint_forward.4} parent=11 // pred_fallthru
        _
    $region12: #{lint_forward.4} parent=5 // pred_fallthru
      _
    %p444 = scmp.lt.s32.totalorder %s20, 2
    // Predicated region
    $region21: #{lint_forward.4} parent=5 // pred_check
      %p445 = pneg %p444
    $region22: #{lint_forward.4} parent=5 // pred_check_branch
      %447 = sbr.rel (%p445) target = $region24
    $region23: #{lint_forward.4} parent=5 // pred_region
      // Predicated region
      $region25: #{lint_forward.4} parent=23 // pred_check
        %p448 = pneg %p99
      $region26: #{lint_forward.4} parent=23 // pred_check_branch
        %450 = sbr.rel (%p448) target = $region28
      $region27: #{lint_forward.4} parent=23 // pred_region
        %p451 = scmp.lt.s32.totalorder %s28, 1
        %s452 = scalar_select %p451, %s28, 1
        %s453 = scalar_lea.vmem %s2, %s452
      $region28: #{lint_forward.4} parent=23 // pred_fallthru
        _
      // Predicated region
      $region29: #{lint_forward.4} parent=23 // pred_check
        %p454 = pneg %p125
      $region30: #{lint_forward.4} parent=23 // pred_check_branch
        %456 = sbr.rel (%p454) target = $region32
      $region31: #{lint_forward.4} parent=23 // pred_region
        %p457 = scmp.lt.s32.totalorder %s28, 1
        %s458 = scalar_select %p457, %s28, 1
        %s459 = scalar_lea.vmem %s3, %s458
      $region32: #{lint_forward.4} parent=23 // pred_fallthru
        _
      // Predicated region
      $region33: #{lint_forward.4} parent=23 // pred_check
        %p460 = pneg %p151
      $region34: #{lint_forward.4} parent=23 // pred_check_branch
        %462 = sbr.rel (%p460) target = $region36
      $region35: #{lint_forward.4} parent=23 // pred_region
        %p463 = scmp.lt.s32.totalorder %s28, 1
        %s464 = scalar_select %p463, %s28, 1
        %s465 = smul.addr %s464, 4
        %s466 = smul.addr %s465, 4
        %s467 = scalar_lea.vmem %s4, %s466
      $region36: #{lint_forward.4} parent=23 // pred_fallthru
        _
      // Predicated region
      $region37: #{lint_forward.4} parent=23 // pred_check
        %p468 = pneg %p177
      $region38: #{lint_forward.4} parent=23 // pred_check_branch
        %470 = sbr.rel (%p468) target = $region40
      $region39: #{lint_forward.4} parent=23 // pred_region
        %p471 = scmp.lt.s32.totalorder %s28, 1
        %s472 = scalar_select %p471, %s28, 1
        %s473 = scalar_lea.vmem %s5, %s472
      $region40: #{lint_forward.4} parent=23 // pred_fallthru
        _
      // Predicated region
      $region41: #{lint_forward.4} parent=23 // pred_check
        %p474 = pneg %p203
      $region42: #{lint_forward.4} parent=23 // pred_check_branch
        %476 = sbr.rel (%p474) target = $region44
      $region43: #{lint_forward.4} parent=23 // pred_region
        %p477 = scmp.lt.s32.totalorder %s28, 1
        %s478 = scalar_select %p477, %s28, 1
        %s479 = smul.addr %s478, 4
        %s480 = smul.addr %s479, 4
        %s481 = scalar_lea.vmem %s6, %s480
      $region44: #{lint_forward.4} parent=23 // pred_fallthru
        _
      // Predicated region
      $region45: #{lint_forward.4} parent=23 // pred_check
        %p482 = pneg %p229
      $region46: #{lint_forward.4} parent=23 // pred_check_branch
        %484 = sbr.rel (%p482) target = $region48
      $region47: #{lint_forward.4} parent=23 // pred_region
        %p485 = scmp.lt.s32.totalorder %s28, 1
        %s486 = scalar_select %p485, %s28, 1
        %s487 = scalar_lea.vmem %s7, %s486
      $region48: #{lint_forward.4} parent=23 // pred_fallthru
        _
      // Predicated region
      $region49: #{lint_forward.4} parent=23 // pred_check
        %p488 = pneg %p255
      $region50: #{lint_forward.4} parent=23 // pred_check_branch
        %490 = sbr.rel (%p488) target = $region52
      $region51: #{lint_forward.4} parent=23 // pred_region
        %p491 = scmp.lt.s32.totalorder %s28, 1
        %s492 = scalar_select %p491, %s28, 1
        %s493 = scalar_lea.vmem %s8, %s492
      $region52: #{lint_forward.4} parent=23 // pred_fallthru
        _
      // Predicated region
      $region53: #{lint_forward.4} parent=23 // pred_check
        %p494 = pneg %p281
      $region54: #{lint_forward.4} parent=23 // pred_check_branch
        %496 = sbr.rel (%p494) target = $region56
      $region55: #{lint_forward.4} parent=23 // pred_region
        %p497 = scmp.lt.s32.totalorder %s28, 1
        %s498 = scalar_select %p497, %s28, 1
        %s499 = scalar_lea.vmem %s9, %s498
      $region56: #{lint_forward.4} parent=23 // pred_fallthru
        _
      // Predicated region
      $region57: #{lint_forward.4} parent=23 // pred_check
        %p500 = pneg %p307
      $region58: #{lint_forward.4} parent=23 // pred_check_branch
        %502 = sbr.rel (%p500) target = $region60
      $region59: #{lint_forward.4} parent=23 // pred_region
        %p503 = scmp.lt.s32.totalorder %s28, 1
        %s504 = scalar_select %p503, %s28, 1
        %s505 = smul.addr %s504, 4
        %s506 = smul.addr %s505, 4
        %s507 = scalar_lea.vmem %s10, %s506
      $region60: #{lint_forward.4} parent=23 // pred_fallthru
        _
      // Predicated region
      $region61: #{lint_forward.4} parent=23 // pred_check
        %p508 = pneg %p333
      $region62: #{lint_forward.4} parent=23 // pred_check_branch
        %510 = sbr.rel (%p508) target = $region64
      $region63: #{lint_forward.4} parent=23 // pred_region
        %p511 = scmp.lt.s32.totalorder %s28, 1
        %s512 = scalar_select %p511, %s28, 1
        %s513 = scalar_lea.vmem %s11, %s512
      $region64: #{lint_forward.4} parent=23 // pred_fallthru
        _
      // Predicated region
      $region65: #{lint_forward.4} parent=23 // pred_check
        %p514 = pneg %p359
      $region66: #{lint_forward.4} parent=23 // pred_check_branch
        %516 = sbr.rel (%p514) target = $region68
      $region67: #{lint_forward.4} parent=23 // pred_region
        %p517 = scmp.lt.s32.totalorder %s28, 1
        %s518 = scalar_select %p517, %s28, 1
        %s519 = smul.addr %s518, 16
        %s520 = smul.addr %s519, 4
        %s521 = scalar_lea.vmem %s12, %s520
      $region68: #{lint_forward.4} parent=23 // pred_fallthru
        _
      // Predicated region
      $region69: #{lint_forward.4} parent=23 // pred_check
        %p522 = pneg %p385
      $region70: #{lint_forward.4} parent=23 // pred_check_branch
        %524 = sbr.rel (%p522) target = $region72
      $region71: #{lint_forward.4} parent=23 // pred_region
        %p525 = scmp.lt.s32.totalorder %s28, 1
        %s526 = scalar_select %p525, %s28, 1
        %s527 = scalar_lea.vmem %s13, %s526
      $region72: #{lint_forward.4} parent=23 // pred_fallthru
        _
    $region24: #{lint_forward.4} parent=5 // pred_fallthru
      _
    %p528 = scmp.le.s32.totalorder 1, %s20
    %p529 = scmp.lt.s32.totalorder %s20, 3
    %p530 = pnand %p528, %p529
    %p531 = pneg %p530
    // Predicated region
    $region73: #{lint_forward.4} parent=5 // pred_check
      _
    $region74: #{lint_forward.4} parent=5 // pred_check_branch
      %533 = sbr.rel (%p530) target = $region76
    $region75: #{lint_forward.4} parent=5 // pred_region
      %s534 = ssub.s32 %s20, 1
      %s535 = smul.u32 2, %s29
      %p536 = scmp.lt.s32.totalorder %s535, 1
      %s537 = scalar_select %p536, %s535, 1
      %s538 = smul.addr %s537, 8
      %s539 = scalar_lea.vmem %s0, %s538
      %p540 = pneg %p58
      %p541 = pneg %p55
      %p542 = pneg %p79
      %p543 = pneg %p76
      %p544 = scmp.lt.s32.totalorder %s30, 1
      %s545 = scalar_select %p544, %s30, 1
      %s546 = scalar_lea.vmem %s2, %s545
      %p547 = pneg %p105
      %p548 = pneg %p102
      %p549 = scmp.lt.s32.totalorder %s30, 1
      %s550 = scalar_select %p549, %s30, 1
      %s551 = scalar_lea.vmem %s3, %s550
      %p552 = pneg %p131
      %p553 = pneg %p128
      %p554 = scmp.lt.s32.totalorder %s30, 1
      %s555 = scalar_select %p554, %s30, 1
      %s556 = smul.addr %s555, 4
      %s557 = smul.addr %s556, 4
      %s558 = scalar_lea.vmem %s4, %s557
      %p559 = pneg %p157
      %p560 = pneg %p154
      %p561 = scmp.lt.s32.totalorder %s30, 1
      %s562 = scalar_select %p561, %s30, 1
      %s563 = scalar_lea.vmem %s5, %s562
      %p564 = pneg %p183
      %p565 = pneg %p180
      %p566 = scmp.lt.s32.totalorder %s30, 1
      %s567 = scalar_select %p566, %s30, 1
      %s568 = smul.addr %s567, 4
      %s569 = smul.addr %s568, 4
      %s570 = scalar_lea.vmem %s6, %s569
      %p571 = pneg %p209
      %p572 = pneg %p206
      %p573 = scmp.lt.s32.totalorder %s30, 1
      %s574 = scalar_select %p573, %s30, 1
      %s575 = scalar_lea.vmem %s7, %s574
      %p576 = pneg %p235
      %p577 = pneg %p232
      %p578 = scmp.lt.s32.totalorder %s30, 1
      %s579 = scalar_select %p578, %s30, 1
      %s580 = scalar_lea.vmem %s8, %s579
      %p581 = pneg %p261
      %p582 = pneg %p258
      %p583 = scmp.lt.s32.totalorder %s30, 1
      %s584 = scalar_select %p583, %s30, 1
      %s585 = scalar_lea.vmem %s9, %s584
      %p586 = pneg %p287
      %p587 = pneg %p284
      %p588 = scmp.lt.s32.totalorder %s30, 1
      %s589 = scalar_select %p588, %s30, 1
      %s590 = smul.addr %s589, 4
      %s591 = smul.addr %s590, 4
      %s592 = scalar_lea.vmem %s10, %s591
      %p593 = pneg %p313
      %p594 = pneg %p310
      %p595 = scmp.lt.s32.totalorder %s30, 1
      %s596 = scalar_select %p595, %s30, 1
      %s597 = scalar_lea.vmem %s11, %s596
      %p598 = pneg %p339
      %p599 = pneg %p336
      %p600 = scmp.lt.s32.totalorder %s30, 1
      %s601 = scalar_select %p600, %s30, 1
      %s602 = smul.addr %s601, 16
      %s603 = smul.addr %s602, 4
      %s604 = scalar_lea.vmem %s12, %s603
      %p605 = pneg %p365
      %p606 = pneg %p362
      %p607 = scmp.lt.s32.totalorder %s30, 1
      %s608 = scalar_select %p607, %s30, 1
      %s609 = scalar_lea.vmem %s13, %s608
      %p610 = pneg %p391
      %p611 = pneg %p388
      %p612 = pneg %p417
      %p613 = pneg %p414
      %s614 = smul.u32 2, %s29
      %p615 = scmp.lt.s32.totalorder %s614, 1
      %s616 = scalar_select %p615, %s614, 1
      %s617 = smul.addr %s616, 8
      %s618 = scalar_lea.vmem %s14, %s617
      %s619 = smul.u32 2, %s29
      %p620 = scmp.lt.s32.totalorder %s619, 1
      %s621 = scalar_select %p620, %s619, 1
      %s622 = smul.addr %s621, 8
      %s623 = scalar_lea.vmem %s0, %s622
      %s624 = smul.u32 2, %s29
      %p625 = scmp.lt.s32.totalorder %s30, 1
      %s626 = scalar_select %p625, %s30, 1
      %s627 = scalar_lea.vmem %s2, %s626
      %p628 = scmp.lt.s32.totalorder %s30, 1
      %s629 = scalar_select %p628, %s30, 1
      %s630 = scalar_lea.vmem %s3, %s629
      %p631 = scmp.lt.s32.totalorder %s30, 1
      %s632 = scalar_select %p631, %s30, 1
      %s633 = smul.addr %s632, 4
      %s634 = smul.addr %s633, 4
      %s635 = scalar_lea.vmem %s4, %s634
      %p636 = scmp.lt.s32.totalorder %s30, 1
      %s637 = scalar_select %p636, %s30, 1
      %s638 = scalar_lea.vmem %s5, %s637
      %p639 = scmp.lt.s32.totalorder %s30, 1
      %s640 = scalar_select %p639, %s30, 1
      %s641 = smul.addr %s640, 4
      %s642 = smul.addr %s641, 4
      %s643 = scalar_lea.vmem %s6, %s642
      %p644 = scmp.lt.s32.totalorder %s30, 1
      %s645 = scalar_select %p644, %s30, 1
      %s646 = scalar_lea.vmem %s7, %s645
      %p647 = scmp.lt.s32.totalorder %s30, 1
      %s648 = scalar_select %p647, %s30, 1
      %s649 = scalar_lea.vmem %s8, %s648
      %p650 = scmp.lt.s32.totalorder %s30, 1
      %s651 = scalar_select %p650, %s30, 1
      %s652 = scalar_lea.vmem %s9, %s651
      %p653 = scmp.lt.s32.totalorder %s30, 1
      %s654 = scalar_select %p653, %s30, 1
      %s655 = smul.addr %s654, 4
      %s656 = smul.addr %s655, 4
      %s657 = scalar_lea.vmem %s10, %s656
      %p658 = scmp.lt.s32.totalorder %s30, 1
      %s659 = scalar_select %p658, %s30, 1
      %s660 = scalar_lea.vmem %s11, %s659
      %p661 = scmp.lt.s32.totalorder %s30, 1
      %s662 = scalar_select %p661, %s30, 1
      %s663 = smul.addr %s662, 16
      %s664 = smul.addr %s663, 4
      %s665 = scalar_lea.vmem %s12, %s664
      %p666 = scmp.lt.s32.totalorder %s30, 1
      %s667 = scalar_select %p666, %s30, 1
      %s668 = scalar_lea.vmem %s13, %s667
      %s669 = smul.u32 2, %s29
      %p670 = scmp.lt.s32.totalorder %s669, 1
      %s671 = scalar_select %p670, %s669, 1
      %s672 = smul.addr %s671, 8
      %s673 = scalar_lea.vmem %s14, %s672
      %s674 = smul.u32 2, %s29
      %p676 = scmp.eq.s32.totalorder %s30, 0
      // Predicated region
      $region77: #{lint_forward.4} parent=75 // pred_check
        %p677 = pneg %p676
      $region78: #{lint_forward.4} parent=75 // pred_check_branch
        %679 = sbr.rel (%p677) target = $region80
      $region79: #{lint_forward.4} parent=75 // pred_region
        %v680 = vld [vmem:[%s623] sm:$0xff]
        %v681 = vld [vmem:[%s623 + $0x8] sm:$0xff]
        %vm682 = vcmask 261120
        %683 = vst.msk [vmem:[%s673] sm:$0xff] %vm682, %v680
        %684 = vst.msk [vmem:[%s673 + $0x8] sm:$0xff] %vm682, %v681
      $region80: #{lint_forward.4} parent=75 // pred_fallthru
        _
      %v685 = vld [vmem:[%s673] sm:$0xff]
      %v686 = vld [vmem:[%s673 + $0x8] sm:$0xff]
      %v687 = vld [vmem:[%s627] sm:$0x1]
      %v688 = vld [vmem:[%s630] sm:$0x1]
      %vm689 = vcmask 261120
      %v690 = vsel %vm689, %v685, 0.0
      %691 = vadd.xlane.f32.xlu0 %v690
      %v692 = vpop.xlane.xlu0 %691
      %v693 = vsel %vm689, %v686, 0.0
      %694 = vadd.xlane.f32.xlu0 %v693
      %v695 = vpop.xlane.xlu0 %694
      %v696 = vrcp.pop 32.0
      %v697 = vmul.f32 %v692, %v696
      %v698 = vmul.f32 %v695, %v696
      %v699 = vsub.f32 %v685, %v697
      %v700 = vsub.f32 %v686, %v698
      %v701 = vmul.f32 %v699, %v699
      %v702 = vmul.f32 %v700, %v700
      %v703 = vsel %vm689, %v701, 0.0
      %704 = vadd.xlane.f32.xlu0 %v703
      %v705 = vpop.xlane.xlu0 %704
      %v706 = vsel %vm689, %v702, 0.0
      %707 = vadd.xlane.f32.xlu0 %v706
      %v708 = vpop.xlane.xlu0 %707
      %v709 = vmul.f32 %v705, %v696
      %v710 = vmul.f32 %v708, %v696
      %v711 = vadd.f32 %v709, 1e-05
      %v712 = vadd.f32 %v710, 1e-05
      %v713 = vrsqrt.pop %v711
      %v714 = vrsqrt.pop %v712
      %v715 = vmul.f32 %v699, %v713
      %v716 = vmul.f32 %v700, %v714
      %v718 = vlaneseq
      %v719 = vshrl.u32 %v718, 7
      %v720 = vsub.s32 0, %v719
      %v721 = vrot.slane %v687, %v720
      %v723 = vmul.f32 %v715, %v721
      %v724 = vmul.f32 %v716, %v721
      %v726 = vlaneseq
      %v727 = vshrl.u32 %v726, 7
      %v728 = vsub.s32 0, %v727
      %v729 = vrot.slane %v688, %v728
      %v731 = vadd.f32 %v723, %v729
      %v732 = vadd.f32 %v724, %v729
      %v733 = vpack.c.bf16 %v732, %v731
      %v734 = vld [vmem:[%s635] sm:$0xf]
      %v735 = vld [vmem:[%s635 + $0x4] sm:$0xf]
      %v736 = vld [vmem:[%s635 + $0x8] sm:$0xf]
      %v737 = vld [vmem:[%s635 + $0xc] sm:$0xf]
      %v738 = vld [vmem:[%s638] sm:$0x1]
      %v740 = vlaneseq
      %v741 = vshrl.u32 %v740, 7
      %v742 = vsub.s32 0, %v741
      %v743 = vrot.slane %v738, %v742
      %v749 = vunpack.c.l.b16 %v734
      %v750 = vunpack.c.l.b16 %v735
      %v751 = vunpack.c.l.b16 %v736
      %v752 = vunpack.c.l.b16 %v737
      %v753 = vpack.c.b16 %v750, %v749
      %v754 = vpack.c.b16 %v752, %v751
      %v758 = vsel %vm689, %v733, 0
      %760 = vmatprep.subr.bf16.mxu0 0
      %761 = vmatpush1.bf16.msra.mxu0 %v753
      %762 = vmatprep.subr.bf16.mxu0 0
      %763 = vmatpush1.bf16.msra.mxu0 %v754
      %764 = vmatprep.subr.bf16.mxu0 0
      %765 = vmatpush1.bf16.msra.mxu0 0
      %766 = vmatprep.subr.bf16.mxu0 0
      %767 = vmatpush1.bf16.msra.mxu0 0
      %768 = vmatprep.subr.bf16.mxu0 0
      %769 = vmatpush1.bf16.msra.mxu0 0
      %770 = vmatprep.subr.bf16.mxu0 0
      %771 = vmatpush1.bf16.msra.mxu0 0
      %772 = vmatprep.subr.bf16.mxu0 0
      %773 = vmatpush1.bf16.msra.mxu0 0
      %774 = vmatprep.subr.bf16.mxu0 0
      %775 = vmatpush1.bf16.msra.mxu0 0
      %776 = vmatprep.subr.bf16.mxu0 0
      %777 = vmatpush1.bf16.msra.mxu0 0
      %778 = vmatprep.subr.bf16.mxu0 0
      %779 = vmatpush1.bf16.msra.mxu0 0
      %780 = vmatprep.subr.bf16.mxu0 0
      %781 = vmatpush1.bf16.msra.mxu0 0
      %782 = vmatprep.subr.bf16.mxu0 0
      %783 = vmatpush1.bf16.msra.mxu0 0
      %784 = vmatprep.subr.bf16.mxu0 0
      %785 = vmatpush1.bf16.msra.mxu0 0
      %786 = vmatprep.subr.bf16.mxu0 0
      %787 = vmatpush1.bf16.msra.mxu0 0
      %788 = vmatprep.subr.bf16.mxu0 0
      %789 = vmatpush1.bf16.msra.mxu0 0
      %790 = vmatprep.subr.bf16.mxu0 0
      %791 = vmatpush1.bf16.msra.mxu0 0
      %792 = vmatprep.mubr.bf16.mxu0 0
      %793 = vmatmul.mubr.bf16.gmra.mrb[0].mxu0 %v758
      %v794 = vpop.f32.mrb[0].mxu0
      %v795 = vadd.f32 %v743, %v794
      %v796 = vpop.f32.mrb[0].mxu0
      %v797 = vpop.f32.mrb[0].mxu0
      %v798 = vadd.f32 %v743, %v797
      %v799 = vpop.f32.mrb[0].mxu0
      %800 = vdwg.mxu0
      %vm801 = vcmp.gt.f32.partialorder %v795, 0.0
      %vm802 = vcmp.gt.f32.partialorder %v798, 0.0
      %v803 = vadd.f32 %v795, 1.0
      %v804 = vadd.f32 %v798, 1.0
      %v805 = vmin.f32 %v795, 0.0
      %v806 = vmin.f32 %v798, 0.0
      %v807 = vmul.f32 %v805, 1.442695
      %v808 = vpow.pop %v807
      %v809 = vmul.f32 %v806, 1.442695
      %v810 = vpow.pop %v809
      %v811 = vsel %vm801, %v803, %v808
      %v812 = vsel %vm802, %v804, %v810
      %v813 = vld [vmem:[%s1] sm:$0xff]
      %v814 = vld [vmem:[%s1 + $0x8] sm:$0xff]
      %v815 = vld [vmem:[%s1 + $0x10] sm:$0xff]
      %v816 = vld [vmem:[%s1 + $0x18] sm:$0xff]
      %818 = vrot.lane.b32.xlu0 %v811, 96
      %v819 = vpop.permute.xlu0 %818
      %821 = vxpose.xlu0.b32.start [1/16] %v819, 128
      %822 = vxpose.xlu0.b32.cont [2/16] 0.0, 128
      %823 = vxpose.xlu0.b32.cont [3/16] 0.0, 128
      %824 = vxpose.xlu0.b32.cont [4/16] 0.0, 128
      %825 = vxpose.xlu0.b32.cont [5/16] 0.0, 128
      %826 = vxpose.xlu0.b32.cont [6/16] 0.0, 128
      %827 = vxpose.xlu0.b32.cont [7/16] 0.0, 128
      %828 = vxpose.xlu0.b32.cont [8/16] 0.0, 128
      %829 = vxpose.xlu0.b32.cont [9/16] 0.0, 128
      %830 = vxpose.xlu0.b32.cont [10/16] 0.0, 128
      %831 = vxpose.xlu0.b32.cont [11/16] 0.0, 128
      %832 = vxpose.xlu0.b32.cont [12/16] 0.0, 128
      %833 = vxpose.xlu0.b32.cont [13/16] 0.0, 128
      %834 = vxpose.xlu0.b32.cont [14/16] 0.0, 128
      %835 = vxpose.xlu0.b32.cont [15/16] 0.0, 128
      %836 = vxpose.xlu0.b32.end [16/16] 0.0, 128
      %v837 = vpop.trf.xlu0
      %v838 = vpop.trf.xlu0
      %v839 = vpop.trf.xlu0
      %v840 = vpop.trf.xlu0
      %v841 = vpop.trf.xlu0
      %v842 = vpop.trf.xlu0
      %v843 = vpop.trf.xlu0
      %v844 = vpop.trf.xlu0
      %v845 = vpop.trf.xlu0
      %v846 = vpop.trf.xlu0
      %v847 = vpop.trf.xlu0
      %v848 = vpop.trf.xlu0
      %v849 = vpop.trf.xlu0
      %v850 = vpop.trf.xlu0
      %v851 = vpop.trf.xlu0
      %v852 = vpop.trf.xlu0
      %854 = vrot.lane.b32.xlu0 %v795, 64
      %v855 = vpop.permute.xlu0 %854
      %vm857 = vcmask 64512
      %v859 = vsel %vm857, %v837, 0
      %v862 = vsel %vm857, %v838, 0
      %v865 = vsel %vm857, %v839, 0
      %v868 = vsel %vm857, %v840, 0
      %870 = vmatprep.subr.mxu0 0.0
      %871 = vmatpush1.msra.mxu0 %v855
      %872 = vmatprep.subr.mxu0 0.0
      %873 = vmatpush1.msra.mxu0 0.0
      %874 = vmatprep.subr.mxu0 0.0
      %875 = vmatpush1.msra.mxu0 0.0
      %876 = vmatprep.subr.mxu0 0.0
      %877 = vmatpush1.msra.mxu0 0.0
      %878 = vmatprep.subr.mxu0 0.0
      %879 = vmatpush1.msra.mxu0 0.0
      %880 = vmatprep.subr.mxu0 0.0
      %881 = vmatpush1.msra.mxu0 0.0
      %882 = vmatprep.subr.mxu0 0.0
      %883 = vmatpush1.msra.mxu0 0.0
      %884 = vmatprep.subr.mxu0 0.0
      %885 = vmatpush1.msra.mxu0 0.0
      %886 = vmatprep.subr.mxu0 0.0
      %887 = vmatpush1.msra.mxu0 0.0
      %888 = vmatprep.subr.mxu0 0.0
      %889 = vmatpush1.msra.mxu0 0.0
      %890 = vmatprep.subr.mxu0 0.0
      %891 = vmatpush1.msra.mxu0 0.0
      %892 = vmatprep.subr.mxu0 0.0
      %893 = vmatpush1.msra.mxu0 0.0
      %894 = vmatprep.subr.mxu0 0.0
      %895 = vmatpush1.msra.mxu0 0.0
      %896 = vmatprep.subr.mxu0 0.0
      %897 = vmatpush1.msra.mxu0 0.0
      %898 = vmatprep.subr.mxu0 0.0
      %899 = vmatpush1.msra.mxu0 0.0
      %900 = vmatprep.subr.mxu0 0.0
      %901 = vmatpush1.msra.mxu0 0.0
      %902 = vmatprep.subr.mxu0 0.0
      %903 = vmatpush1.msra.mxu0 0.0
      %904 = vmatprep.subr.mxu0 0.0
      %905 = vmatpush1.msra.mxu0 0.0
      %906 = vmatprep.subr.mxu0 0.0
      %907 = vmatpush1.msra.mxu0 0.0
      %908 = vmatprep.subr.mxu0 0.0
      %909 = vmatpush1.msra.mxu0 0.0
      %910 = vmatprep.subr.mxu0 0.0
      %911 = vmatpush1.msra.mxu0 0.0
      %912 = vmatprep.subr.mxu0 0.0
      %913 = vmatpush1.msra.mxu0 0.0
      %914 = vmatprep.subr.mxu0 0.0
      %915 = vmatpush1.msra.mxu0 0.0
      %916 = vmatprep.subr.mxu0 0.0
      %917 = vmatpush1.msra.mxu0 0.0
      %918 = vmatprep.subr.mxu0 0.0
      %919 = vmatpush1.msra.mxu0 0.0
      %920 = vmatprep.subr.mxu0 0.0
      %921 = vmatpush1.msra.mxu0 0.0
      %922 = vmatprep.subr.mxu0 0.0
      %923 = vmatpush1.msra.mxu0 0.0
      %924 = vmatprep.subr.mxu0 0.0
      %925 = vmatpush1.msra.mxu0 0.0
      %926 = vmatprep.subr.mxu0 0.0
      %927 = vmatpush1.msra.mxu0 0.0
      %928 = vmatprep.subr.mxu0 0.0
      %929 = vmatpush1.msra.mxu0 0.0
      %930 = vmatprep.subr.mxu0 0.0
      %931 = vmatpush1.msra.mxu0 0.0
      %932 = vmatprep.subr.mxu0 0.0
      %933 = vmatpush1.msra.mxu0 0.0
      %934 = vmatprep.mubr.f32.mxu0 0.0
      %935 = vmatmul.mubr.f32.gmra.mrb[0].mxu0 %v859
      %v936 = vpop.f32.mrb[0].mxu0
      %v937 = vadd.f32 0.0, %v936
      %v938 = vpop.f32.mrb[0].mxu0
      %939 = vmatprep.mubr.f32.mxu0 0.0
      %940 = vmatmul.mubr.f32.gmra.mrb[0].mxu0 %v862
      %v941 = vpop.f32.mrb[0].mxu0
      %v942 = vadd.f32 0.0, %v941
      %v943 = vpop.f32.mrb[0].mxu0
      %944 = vmatprep.mubr.f32.mxu0 0.0
      %945 = vmatmul.mubr.f32.gmra.mrb[0].mxu0 %v865
      %v946 = vpop.f32.mrb[0].mxu0
      %v947 = vadd.f32 0.0, %v946
      %v948 = vpop.f32.mrb[0].mxu0
      %949 = vmatprep.mubr.f32.mxu0 0.0
      %950 = vmatmul.mubr.f32.gmra.mrb[0].mxu0 %v868
      %v951 = vpop.f32.mrb[0].mxu0
      %v952 = vadd.f32 0.0, %v951
      %v953 = vpop.f32.mrb[0].mxu0
      %954 = vdwg.mxu0
      %956 = vrot.lane.b32.xlu0 %v812, 96
      %v957 = vpop.permute.xlu0 %956
      %959 = vxpose.xlu0.b32.start [1/16] %v957, 128
      %960 = vxpose.xlu0.b32.cont [2/16] 0.0, 128
      %961 = vxpose.xlu0.b32.cont [3/16] 0.0, 128
      %962 = vxpose.xlu0.b32.cont [4/16] 0.0, 128
      %963 = vxpose.xlu0.b32.cont [5/16] 0.0, 128
      %964 = vxpose.xlu0.b32.cont [6/16] 0.0, 128
      %965 = vxpose.xlu0.b32.cont [7/16] 0.0, 128
      %966 = vxpose.xlu0.b32.cont [8/16] 0.0, 128
      %967 = vxpose.xlu0.b32.cont [9/16] 0.0, 128
      %968 = vxpose.xlu0.b32.cont [10/16] 0.0, 128
      %969 = vxpose.xlu0.b32.cont [11/16] 0.0, 128
      %970 = vxpose.xlu0.b32.cont [12/16] 0.0, 128
      %971 = vxpose.xlu0.b32.cont [13/16] 0.0, 128
      %972 = vxpose.xlu0.b32.cont [14/16] 0.0, 128
      %973 = vxpose.xlu0.b32.cont [15/16] 0.0, 128
      %974 = vxpose.xlu0.b32.end [16/16] 0.0, 128
      %v975 = vpop.trf.xlu0
      %v976 = vpop.trf.xlu0
      %v977 = vpop.trf.xlu0
      %v978 = vpop.trf.xlu0
      %v979 = vpop.trf.xlu0
      %v980 = vpop.trf.xlu0
      %v981 = vpop.trf.xlu0
      %v982 = vpop.trf.xlu0
      %v983 = vpop.trf.xlu0
      %v984 = vpop.trf.xlu0
      %v985 = vpop.trf.xlu0
      %v986 = vpop.trf.xlu0
      %v987 = vpop.trf.xlu0
      %v988 = vpop.trf.xlu0
      %v989 = vpop.trf.xlu0
      %v990 = vpop.trf.xlu0
      %992 = vrot.lane.b32.xlu0 %v798, 64
      %v993 = vpop.permute.xlu0 %992
      %v996 = vsel %vm857, %v975, 0
      %v999 = vsel %vm857, %v976, 0
      %v1002 = vsel %vm857, %v977, 0
      %v1005 = vsel %vm857, %v978, 0
      %1007 = vmatprep.subr.mxu0 0.0
      %1008 = vmatpush1.msra.mxu0 %v993
      %1009 = vmatprep.subr.mxu0 0.0
      %1010 = vmatpush1.msra.mxu0 0.0
      %1011 = vmatprep.subr.mxu0 0.0
      %1012 = vmatpush1.msra.mxu0 0.0
      %1013 = vmatprep.subr.mxu0 0.0
      %1014 = vmatpush1.msra.mxu0 0.0
      %1015 = vmatprep.subr.mxu0 0.0
      %1016 = vmatpush1.msra.mxu0 0.0
      %1017 = vmatprep.subr.mxu0 0.0
      %1018 = vmatpush1.msra.mxu0 0.0
      %1019 = vmatprep.subr.mxu0 0.0
      %1020 = vmatpush1.msra.mxu0 0.0
      %1021 = vmatprep.subr.mxu0 0.0
      %1022 = vmatpush1.msra.mxu0 0.0
      %1023 = vmatprep.subr.mxu0 0.0
      %1024 = vmatpush1.msra.mxu0 0.0
      %1025 = vmatprep.subr.mxu0 0.0
      %1026 = vmatpush1.msra.mxu0 0.0
      %1027 = vmatprep.subr.mxu0 0.0
      %1028 = vmatpush1.msra.mxu0 0.0
      %1029 = vmatprep.subr.mxu0 0.0
      %1030 = vmatpush1.msra.mxu0 0.0
      %1031 = vmatprep.subr.mxu0 0.0
      %1032 = vmatpush1.msra.mxu0 0.0
      %1033 = vmatprep.subr.mxu0 0.0
      %1034 = vmatpush1.msra.mxu0 0.0
      %1035 = vmatprep.subr.mxu0 0.0
      %1036 = vmatpush1.msra.mxu0 0.0
      %1037 = vmatprep.subr.mxu0 0.0
      %1038 = vmatpush1.msra.mxu0 0.0
      %1039 = vmatprep.subr.mxu0 0.0
      %1040 = vmatpush1.msra.mxu0 0.0
      %1041 = vmatprep.subr.mxu0 0.0
      %1042 = vmatpush1.msra.mxu0 0.0
      %1043 = vmatprep.subr.mxu0 0.0
      %1044 = vmatpush1.msra.mxu0 0.0
      %1045 = vmatprep.subr.mxu0 0.0
      %1046 = vmatpush1.msra.mxu0 0.0
      %1047 = vmatprep.subr.mxu0 0.0
      %1048 = vmatpush1.msra.mxu0 0.0
      %1049 = vmatprep.subr.mxu0 0.0
      %1050 = vmatpush1.msra.mxu0 0.0
      %1051 = vmatprep.subr.mxu0 0.0
      %1052 = vmatpush1.msra.mxu0 0.0
      %1053 = vmatprep.subr.mxu0 0.0
      %1054 = vmatpush1.msra.mxu0 0.0
      %1055 = vmatprep.subr.mxu0 0.0
      %1056 = vmatpush1.msra.mxu0 0.0
      %1057 = vmatprep.subr.mxu0 0.0
      %1058 = vmatpush1.msra.mxu0 0.0
      %1059 = vmatprep.subr.mxu0 0.0
      %1060 = vmatpush1.msra.mxu0 0.0
      %1061 = vmatprep.subr.mxu0 0.0
      %1062 = vmatpush1.msra.mxu0 0.0
      %1063 = vmatprep.subr.mxu0 0.0
      %1064 = vmatpush1.msra.mxu0 0.0
      %1065 = vmatprep.subr.mxu0 0.0
      %1066 = vmatpush1.msra.mxu0 0.0
      %1067 = vmatprep.subr.mxu0 0.0
      %1068 = vmatpush1.msra.mxu0 0.0
      %1069 = vmatprep.subr.mxu0 0.0
      %1070 = vmatpush1.msra.mxu0 0.0
      %1071 = vmatprep.mubr.f32.mxu0 0.0
      %1072 = vmatmul.mubr.f32.gmra.mrb[0].mxu0 %v996
      %v1073 = vpop.f32.mrb[0].mxu0
      %v1074 = vadd.f32 0.0, %v1073
      %v1075 = vpop.f32.mrb[0].mxu0
      %1076 = vmatprep.mubr.f32.mxu0 0.0
      %1077 = vmatmul.mubr.f32.gmra.mrb[0].mxu0 %v999
      %v1078 = vpop.f32.mrb[0].mxu0
      %v1079 = vadd.f32 0.0, %v1078
      %v1080 = vpop.f32.mrb[0].mxu0
      %1081 = vmatprep.mubr.f32.mxu0 0.0
      %1082 = vmatmul.mubr.f32.gmra.mrb[0].mxu0 %v1002
      %v1083 = vpop.f32.mrb[0].mxu0
      %v1084 = vadd.f32 0.0, %v1083
      %v1085 = vpop.f32.mrb[0].mxu0
      %1086 = vmatprep.mubr.f32.mxu0 0.0
      %1087 = vmatmul.mubr.f32.gmra.mrb[0].mxu0 %v1005
      %v1088 = vpop.f32.mrb[0].mxu0
      %v1089 = vadd.f32 0.0, %v1088
      %v1090 = vpop.f32.mrb[0].mxu0
      %1091 = vdwg.mxu0
      %v1092 = vmul.f32 %v937, %v813
      %v1093 = vmul.f32 %v942, %v814
      %v1094 = vmul.f32 %v947, %v815
      %v1095 = vmul.f32 %v952, %v816
      %v1096 = vmul.f32 %v1074, %v813
      %v1097 = vmul.f32 %v1079, %v814
      %v1098 = vmul.f32 %v1084, %v815
      %v1099 = vmul.f32 %v1089, %v816
      %v1100 = vsel %vm689, %v811, 0
      %1102 = vmatprep.subr.mxu0 0.0
      %1103 = vmatpush1.msra.mxu0 %v1092
      %1104 = vmatprep.subr.mxu0 0.0
      %1105 = vmatpush1.msra.mxu0 %v1093
      %1106 = vmatprep.subr.mxu0 0.0
      %1107 = vmatpush1.msra.mxu0 %v1094
      %1108 = vmatprep.subr.mxu0 0.0
      %1109 = vmatpush1.msra.mxu0 %v1095
      %1110 = vmatprep.subr.mxu0 0.0
      %1111 = vmatpush1.msra.mxu0 0.0
      %1112 = vmatprep.subr.mxu0 0.0
      %1113 = vmatpush1.msra.mxu0 0.0
      %1114 = vmatprep.subr.mxu0 0.0
      %1115 = vmatpush1.msra.mxu0 0.0
      %1116 = vmatprep.subr.mxu0 0.0
      %1117 = vmatpush1.msra.mxu0 0.0
      %1118 = vmatprep.subr.mxu0 0.0
      %1119 = vmatpush1.msra.mxu0 0.0
      %1120 = vmatprep.subr.mxu0 0.0
      %1121 = vmatpush1.msra.mxu0 0.0
      %1122 = vmatprep.subr.mxu0 0.0
      %1123 = vmatpush1.msra.mxu0 0.0
      %1124 = vmatprep.subr.mxu0 0.0
      %1125 = vmatpush1.msra.mxu0 0.0
      %1126 = vmatprep.subr.mxu0 0.0
      %1127 = vmatpush1.msra.mxu0 0.0
      %1128 = vmatprep.subr.mxu0 0.0
      %1129 = vmatpush1.msra.mxu0 0.0
      %1130 = vmatprep.subr.mxu0 0.0
      %1131 = vmatpush1.msra.mxu0 0.0
      %1132 = vmatprep.subr.mxu0 0.0
      %1133 = vmatpush1.msra.mxu0 0.0
      %1134 = vmatprep.subr.mxu0 0.0
      %1135 = vmatpush1.msra.mxu0 0.0
      %1136 = vmatprep.subr.mxu0 0.0
      %1137 = vmatpush1.msra.mxu0 0.0
      %1138 = vmatprep.subr.mxu0 0.0
      %1139 = vmatpush1.msra.mxu0 0.0
      %1140 = vmatprep.subr.mxu0 0.0
      %1141 = vmatpush1.msra.mxu0 0.0
      %1142 = vmatprep.subr.mxu0 0.0
      %1143 = vmatpush1.msra.mxu0 0.0
      %1144 = vmatprep.subr.mxu0 0.0
      %1145 = vmatpush1.msra.mxu0 0.0
      %1146 = vmatprep.subr.mxu0 0.0
      %1147 = vmatpush1.msra.mxu0 0.0
      %1148 = vmatprep.subr.mxu0 0.0
      %1149 = vmatpush1.msra.mxu0 0.0
      %1150 = vmatprep.subr.mxu0 0.0
      %1151 = vmatpush1.msra.mxu0 0.0
      %1152 = vmatprep.subr.mxu0 0.0
      %1153 = vmatpush1.msra.mxu0 0.0
      %1154 = vmatprep.subr.mxu0 0.0
      %1155 = vmatpush1.msra.mxu0 0.0
      %1156 = vmatprep.subr.mxu0 0.0
      %1157 = vmatpush1.msra.mxu0 0.0
      %1158 = vmatprep.subr.mxu0 0.0
      %1159 = vmatpush1.msra.mxu0 0.0
      %1160 = vmatprep.subr.mxu0 0.0
      %1161 = vmatpush1.msra.mxu0 0.0
      %1162 = vmatprep.subr.mxu0 0.0
      %1163 = vmatpush1.msra.mxu0 0.0
      %1164 = vmatprep.subr.mxu0 0.0
      %1165 = vmatpush1.msra.mxu0 0.0
      %1166 = vmatprep.mubr.f32.mxu0 0.0
      %1167 = vmatmul.mubr.f32.gmra.mrb[0].mxu0 %v1100
      %v1168 = vpop.f32.mrb[0].mxu0
      %v1169 = vadd.f32 0.0, %v1168
      %v1170 = vpop.f32.mrb[0].mxu0
      %1171 = vdwg.mxu0
      %v1172 = vsel %vm689, %v812, 0
      %1174 = vmatprep.subr.mxu0 0.0
      %1175 = vmatpush1.msra.mxu0 %v1096
      %1176 = vmatprep.subr.mxu0 0.0
      %1177 = vmatpush1.msra.mxu0 %v1097
      %1178 = vmatprep.subr.mxu0 0.0
      %1179 = vmatpush1.msra.mxu0 %v1098
      %1180 = vmatprep.subr.mxu0 0.0
      %1181 = vmatpush1.msra.mxu0 %v1099
      %1182 = vmatprep.subr.mxu0 0.0
      %1183 = vmatpush1.msra.mxu0 0.0
      %1184 = vmatprep.subr.mxu0 0.0
      %1185 = vmatpush1.msra.mxu0 0.0
      %1186 = vmatprep.subr.mxu0 0.0
      %1187 = vmatpush1.msra.mxu0 0.0
      %1188 = vmatprep.subr.mxu0 0.0
      %1189 = vmatpush1.msra.mxu0 0.0
      %1190 = vmatprep.subr.mxu0 0.0
      %1191 = vmatpush1.msra.mxu0 0.0
      %1192 = vmatprep.subr.mxu0 0.0
      %1193 = vmatpush1.msra.mxu0 0.0
      %1194 = vmatprep.subr.mxu0 0.0
      %1195 = vmatpush1.msra.mxu0 0.0
      %1196 = vmatprep.subr.mxu0 0.0
      %1197 = vmatpush1.msra.mxu0 0.0
      %1198 = vmatprep.subr.mxu0 0.0
      %1199 = vmatpush1.msra.mxu0 0.0
      %1200 = vmatprep.subr.mxu0 0.0
      %1201 = vmatpush1.msra.mxu0 0.0
      %1202 = vmatprep.subr.mxu0 0.0
      %1203 = vmatpush1.msra.mxu0 0.0
      %1204 = vmatprep.subr.mxu0 0.0
      %1205 = vmatpush1.msra.mxu0 0.0
      %1206 = vmatprep.subr.mxu0 0.0
      %1207 = vmatpush1.msra.mxu0 0.0
      %1208 = vmatprep.subr.mxu0 0.0
      %1209 = vmatpush1.msra.mxu0 0.0
      %1210 = vmatprep.subr.mxu0 0.0
      %1211 = vmatpush1.msra.mxu0 0.0
      %1212 = vmatprep.subr.mxu0 0.0
      %1213 = vmatpush1.msra.mxu0 0.0
      %1214 = vmatprep.subr.mxu0 0.0
      %1215 = vmatpush1.msra.mxu0 0.0
      %1216 = vmatprep.subr.mxu0 0.0
      %1217 = vmatpush1.msra.mxu0 0.0
      %1218 = vmatprep.subr.mxu0 0.0
      %1219 = vmatpush1.msra.mxu0 0.0
      %1220 = vmatprep.subr.mxu0 0.0
      %1221 = vmatpush1.msra.mxu0 0.0
      %1222 = vmatprep.subr.mxu0 0.0
      %1223 = vmatpush1.msra.mxu0 0.0
      %1224 = vmatprep.subr.mxu0 0.0
      %1225 = vmatpush1.msra.mxu0 0.0
      %1226 = vmatprep.subr.mxu0 0.0
      %1227 = vmatpush1.msra.mxu0 0.0
      %1228 = vmatprep.subr.mxu0 0.0
      %1229 = vmatpush1.msra.mxu0 0.0
      %1230 = vmatprep.subr.mxu0 0.0
      %1231 = vmatpush1.msra.mxu0 0.0
      %1232 = vmatprep.subr.mxu0 0.0
      %1233 = vmatpush1.msra.mxu0 0.0
      %1234 = vmatprep.subr.mxu0 0.0
      %1235 = vmatpush1.msra.mxu0 0.0
      %1236 = vmatprep.subr.mxu0 0.0
      %1237 = vmatpush1.msra.mxu0 0.0
      %1238 = vmatprep.mubr.f32.mxu0 0.0
      %1239 = vmatmul.mubr.f32.gmra.mrb[0].mxu0 %v1172
      %v1240 = vpop.f32.mrb[0].mxu0
      %v1241 = vadd.f32 0.0, %v1240
      %v1242 = vpop.f32.mrb[0].mxu0
      %1243 = vdwg.mxu0
      %vm1244 = vcmask 523520
      %v1245 = vsel %vm1244, %v811, 0.0
      %v1246 = vrot.slane %v1245, 4
      %v1247 = vadd.f32 %v1245, %v1246
      %v1248 = vrot.slane %v1247, 2
      %v1249 = vadd.f32 %v1247, %v1248
      %v1250 = vrot.slane %v1249, 1
      %v1251 = vadd.f32 %v1249, %v1250
      %v1252 = vsel %vm1244, %v812, 0.0
      %v1253 = vrot.slane %v1252, 4
      %v1254 = vadd.f32 %v1252, %v1253
      %v1255 = vrot.slane %v1254, 2
      %v1256 = vadd.f32 %v1254, %v1255
      %v1257 = vrot.slane %v1256, 1
      %v1258 = vadd.f32 %v1256, %v1257
      %1261 = vrot.lane.b32.xlu0 %v1251, 96
      %v1262 = vpop.permute.xlu0 %1261
      %1263 = vrot.lane.b32.xlu0 %v1258, 96
      %v1264 = vpop.permute.xlu0 %1263
      %v1267 = vmul.f32 %v811, %v1262
      %v1268 = vmul.f32 %v812, %v1264
      %v1270 = vsel %vm689, %v1267, 0
      %v1273 = vsel %vm689, %v1268, 0
      %1275 = vmatprep.subr.mxu0 0.0
      %1276 = vmatpush1.msra.mxu0 %v813
      %1277 = vmatprep.subr.mxu0 0.0
      %1278 = vmatpush1.msra.mxu0 %v814
      %1279 = vmatprep.subr.mxu0 0.0
      %1280 = vmatpush1.msra.mxu0 %v815
      %1281 = vmatprep.subr.mxu0 0.0
      %1282 = vmatpush1.msra.mxu0 %v816
      %1283 = vmatprep.subr.mxu0 0.0
      %1284 = vmatpush1.msra.mxu0 0.0
      %1285 = vmatprep.subr.mxu0 0.0
      %1286 = vmatpush1.msra.mxu0 0.0
      %1287 = vmatprep.subr.mxu0 0.0
      %1288 = vmatpush1.msra.mxu0 0.0
      %1289 = vmatprep.subr.mxu0 0.0
      %1290 = vmatpush1.msra.mxu0 0.0
      %1291 = vmatprep.subr.mxu0 0.0
      %1292 = vmatpush1.msra.mxu0 0.0
      %1293 = vmatprep.subr.mxu0 0.0
      %1294 = vmatpush1.msra.mxu0 0.0
      %1295 = vmatprep.subr.mxu0 0.0
      %1296 = vmatpush1.msra.mxu0 0.0
      %1297 = vmatprep.subr.mxu0 0.0
      %1298 = vmatpush1.msra.mxu0 0.0
      %1299 = vmatprep.subr.mxu0 0.0
      %1300 = vmatpush1.msra.mxu0 0.0
      %1301 = vmatprep.subr.mxu0 0.0
      %1302 = vmatpush1.msra.mxu0 0.0
      %1303 = vmatprep.subr.mxu0 0.0
      %1304 = vmatpush1.msra.mxu0 0.0
      %1305 = vmatprep.subr.mxu0 0.0
      %1306 = vmatpush1.msra.mxu0 0.0
      %1307 = vmatprep.subr.mxu0 0.0
      %1308 = vmatpush1.msra.mxu0 0.0
      %1309 = vmatprep.subr.mxu0 0.0
      %1310 = vmatpush1.msra.mxu0 0.0
      %1311 = vmatprep.subr.mxu0 0.0
      %1312 = vmatpush1.msra.mxu0 0.0
      %1313 = vmatprep.subr.mxu0 0.0
      %1314 = vmatpush1.msra.mxu0 0.0
      %1315 = vmatprep.subr.mxu0 0.0
      %1316 = vmatpush1.msra.mxu0 0.0
      %1317 = vmatprep.subr.mxu0 0.0
      %1318 = vmatpush1.msra.mxu0 0.0
      %1319 = vmatprep.subr.mxu0 0.0
      %1320 = vmatpush1.msra.mxu0 0.0
      %1321 = vmatprep.subr.mxu0 0.0
      %1322 = vmatpush1.msra.mxu0 0.0
      %1323 = vmatprep.subr.mxu0 0.0
      %1324 = vmatpush1.msra.mxu0 0.0
      %1325 = vmatprep.subr.mxu0 0.0
      %1326 = vmatpush1.msra.mxu0 0.0
      %1327 = vmatprep.subr.mxu0 0.0
      %1328 = vmatpush1.msra.mxu0 0.0
      %1329 = vmatprep.subr.mxu0 0.0
      %1330 = vmatpush1.msra.mxu0 0.0
      %1331 = vmatprep.subr.mxu0 0.0
      %1332 = vmatpush1.msra.mxu0 0.0
      %1333 = vmatprep.subr.mxu0 0.0
      %1334 = vmatpush1.msra.mxu0 0.0
      %1335 = vmatprep.subr.mxu0 0.0
      %1336 = vmatpush1.msra.mxu0 0.0
      %1337 = vmatprep.subr.mxu0 0.0
      %1338 = vmatpush1.msra.mxu0 0.0
      %1339 = vmatprep.mubr.f32.mxu0 0.0
      %1340 = vmatmul.mubr.f32.gmra.mrb[0].mxu0 %v1270
      %v1341 = vpop.f32.mrb[0].mxu0
      %v1342 = vadd.f32 1e-06, %v1341
      %v1343 = vpop.f32.mrb[0].mxu0
      %1344 = vmatprep.mubr.f32.mxu0 0.0
      %1345 = vmatmul.mubr.f32.gmra.mrb[0].mxu0 %v1273
      %v1346 = vpop.f32.mrb[0].mxu0
      %v1347 = vadd.f32 1e-06, %v1346
      %v1348 = vpop.f32.mrb[0].mxu0
      %1349 = vdwg.mxu0
      %v1350 = vrcp.pop %v1342
      %v1351 = vrcp.pop %v1347
      %v1352 = vmul.f32 %v1169, %v1350
      %v1353 = vmul.f32 %v1241, %v1351
      %v1354 = vpack.c.bf16 %v1353, %v1352
      %v1355 = vld [vmem:[%s643] sm:$0xf]
      %v1356 = vld [vmem:[%s643 + $0x4] sm:$0xf]
      %v1357 = vld [vmem:[%s643 + $0x8] sm:$0xf]
      %v1358 = vld [vmem:[%s643 + $0xc] sm:$0xf]
      %v1359 = vld [vmem:[%s646] sm:$0x1]
      %v1361 = vlaneseq
      %v1362 = vshrl.u32 %v1361, 7
      %v1363 = vsub.s32 0, %v1362
      %v1364 = vrot.slane %v1359, %v1363
      %v1370 = vunpack.c.l.b16 %v1355
      %v1371 = vunpack.c.l.b16 %v1356
      %v1372 = vunpack.c.l.b16 %v1357
      %v1373 = vunpack.c.l.b16 %v1358
      %v1374 = vpack.c.b16 %v1371, %v1370
      %v1375 = vpack.c.b16 %v1373, %v1372
      %v1379 = vsel %vm689, %v1354, 0
      %1381 = vmatprep.subr.bf16.mxu0 0
      %1382 = vmatpush1.bf16.msra.mxu0 %v1374
      %1383 = vmatprep.subr.bf16.mxu0 0
      %1384 = vmatpush1.bf16.msra.mxu0 %v1375
      %1385 = vmatprep.subr.bf16.mxu0 0
      %1386 = vmatpush1.bf16.msra.mxu0 0
      %1387 = vmatprep.subr.bf16.mxu0 0
      %1388 = vmatpush1.bf16.msra.mxu0 0
      %1389 = vmatprep.subr.bf16.mxu0 0
      %1390 = vmatpush1.bf16.msra.mxu0 0
      %1391 = vmatprep.subr.bf16.mxu0 0
      %1392 = vmatpush1.bf16.msra.mxu0 0
      %1393 = vmatprep.subr.bf16.mxu0 0
      %1394 = vmatpush1.bf16.msra.mxu0 0
      %1395 = vmatprep.subr.bf16.mxu0 0
      %1396 = vmatpush1.bf16.msra.mxu0 0
      %1397 = vmatprep.subr.bf16.mxu0 0
      %1398 = vmatpush1.bf16.msra.mxu0 0
      %1399 = vmatprep.subr.bf16.mxu0 0
      %1400 = vmatpush1.bf16.msra.mxu0 0
      %1401 = vmatprep.subr.bf16.mxu0 0
      %1402 = vmatpush1.bf16.msra.mxu0 0
      %1403 = vmatprep.subr.bf16.mxu0 0
      %1404 = vmatpush1.bf16.msra.mxu0 0
      %1405 = vmatprep.subr.bf16.mxu0 0
      %1406 = vmatpush1.bf16.msra.mxu0 0
      %1407 = vmatprep.subr.bf16.mxu0 0
      %1408 = vmatpush1.bf16.msra.mxu0 0
      %1409 = vmatprep.subr.bf16.mxu0 0
      %1410 = vmatpush1.bf16.msra.mxu0 0
      %1411 = vmatprep.subr.bf16.mxu0 0
      %1412 = vmatpush1.bf16.msra.mxu0 0
      %1413 = vmatprep.mubr.bf16.mxu0 0
      %1414 = vmatmul.mubr.bf16.gmra.mrb[0].mxu0 %v1379
      %v1415 = vpop.f32.mrb[0].mxu0
      %v1416 = vadd.f32 %v1364, %v1415
      %v1417 = vpop.f32.mrb[0].mxu0
      %v1418 = vpop.f32.mrb[0].mxu0
      %v1419 = vadd.f32 %v1364, %v1418
      %v1420 = vpop.f32.mrb[0].mxu0
      %1421 = vdwg.mxu0
      %v1422 = vadd.f32 %v685, %v1416
      %v1423 = vadd.f32 %v686, %v1419
      %v1424 = vld [vmem:[%s649] sm:$0x1]
      %v1425 = vld [vmem:[%s652] sm:$0x1]
      %v1426 = vsel %vm689, %v1422, 0.0
      %1427 = vadd.xlane.f32.xlu0 %v1426
      %v1428 = vpop.xlane.xlu0 %1427
      %v1429 = vsel %vm689, %v1423, 0.0
      %1430 = vadd.xlane.f32.xlu0 %v1429
      %v1431 = vpop.xlane.xlu0 %1430
      %v1432 = vmul.f32 %v1428, %v696
      %v1433 = vmul.f32 %v1431, %v696
      %v1434 = vsub.f32 %v1422, %v1432
      %v1435 = vsub.f32 %v1423, %v1433
      %v1436 = vmul.f32 %v1434, %v1434
      %v1437 = vmul.f32 %v1435, %v1435
      %v1438 = vsel %vm689, %v1436, 0.0
      %1439 = vadd.xlane.f32.xlu0 %v1438
      %v1440 = vpop.xlane.xlu0 %1439
      %v1441 = vsel %vm689, %v1437, 0.0
      %1442 = vadd.xlane.f32.xlu0 %v1441
      %v1443 = vpop.xlane.xlu0 %1442
      %v1444 = vmul.f32 %v1440, %v696
      %v1445 = vmul.f32 %v1443, %v696
      %v1446 = vadd.f32 %v1444, 1e-05
      %v1447 = vadd.f32 %v1445, 1e-05
      %v1448 = vrsqrt.pop %v1446
      %v1449 = vrsqrt.pop %v1447
      %v1450 = vmul.f32 %v1434, %v1448
      %v1451 = vmul.f32 %v1435, %v1449
      %v1453 = vlaneseq
      %v1454 = vshrl.u32 %v1453, 7
      %v1455 = vsub.s32 0, %v1454
      %v1456 = vrot.slane %v1424, %v1455
      %v1458 = vmul.f32 %v1450, %v1456
      %v1459 = vmul.f32 %v1451, %v1456
      %v1461 = vlaneseq
      %v1462 = vshrl.u32 %v1461, 7
      %v1463 = vsub.s32 0, %v1462
      %v1464 = vrot.slane %v1425, %v1463
      %v1466 = vadd.f32 %v1458, %v1464
      %v1467 = vadd.f32 %v1459, %v1464
      %v1468 = vpack.c.bf16 %v1467, %v1466
      %v1469 = vld [vmem:[%s657] sm:$0xf]
      %v1470 = vld [vmem:[%s657 + $0x4] sm:$0xf]
      %v1471 = vld [vmem:[%s657 + $0x8] sm:$0xf]
      %v1472 = vld [vmem:[%s657 + $0xc] sm:$0xf]
      %v1473 = vld [vmem:[%s660] sm:$0x1]
      %v1475 = vlaneseq
      %v1476 = vshrl.u32 %v1475, 7
      %v1477 = vsub.s32 0, %v1476
      %v1478 = vrot.slane %v1473, %v1477
      %v1484 = vunpack.c.l.b16 %v1469
      %v1485 = vunpack.c.l.b16 %v1470
      %v1486 = vunpack.c.l.b16 %v1471
      %v1487 = vunpack.c.l.b16 %v1472
      %v1488 = vpack.c.b16 %v1485, %v1484
      %v1489 = vpack.c.b16 %v1487, %v1486
      %v1493 = vsel %vm689, %v1468, 0
      %1495 = vmatprep.subr.bf16.mxu0 0
      %1496 = vmatpush1.bf16.msra.mxu0 %v1488
      %1497 = vmatprep.subr.bf16.mxu0 0
      %1498 = vmatpush1.bf16.msra.mxu0 %v1489
      %1499 = vmatprep.subr.bf16.mxu0 0
      %1500 = vmatpush1.bf16.msra.mxu0 0
      %1501 = vmatprep.subr.bf16.mxu0 0
      %1502 = vmatpush1.bf16.msra.mxu0 0
      %1503 = vmatprep.subr.bf16.mxu0 0
      %1504 = vmatpush1.bf16.msra.mxu0 0
      %1505 = vmatprep.subr.bf16.mxu0 0
      %1506 = vmatpush1.bf16.msra.mxu0 0
      %1507 = vmatprep.subr.bf16.mxu0 0
      %1508 = vmatpush1.bf16.msra.mxu0 0
      %1509 = vmatprep.subr.bf16.mxu0 0
      %1510 = vmatpush1.bf16.msra.mxu0 0
      %1511 = vmatprep.subr.bf16.mxu0 0
      %1512 = vmatpush1.bf16.msra.mxu0 0
      %1513 = vmatprep.subr.bf16.mxu0 0
      %1514 = vmatpush1.bf16.msra.mxu0 0
      %1515 = vmatprep.subr.bf16.mxu0 0
      %1516 = vmatpush1.bf16.msra.mxu0 0
      %1517 = vmatprep.subr.bf16.mxu0 0
      %1518 = vmatpush1.bf16.msra.mxu0 0
      %1519 = vmatprep.subr.bf16.mxu0 0
      %1520 = vmatpush1.bf16.msra.mxu0 0
      %1521 = vmatprep.subr.bf16.mxu0 0
      %1522 = vmatpush1.bf16.msra.mxu0 0
      %1523 = vmatprep.subr.bf16.mxu0 0
      %1524 = vmatpush1.bf16.msra.mxu0 0
      %1525 = vmatprep.subr.bf16.mxu0 0
      %1526 = vmatpush1.bf16.msra.mxu0 0
      %1527 = vmatprep.mubr.bf16.mxu0 0
      %1528 = vmatmul.mubr.bf16.gmra.mrb[0].mxu0 %v1493
      %v1529 = vpop.f32.mrb[0].mxu0
      %v1530 = vadd.f32 %v1478, %v1529
      %v1531 = vpop.f32.mrb[0].mxu0
      %v1532 = vpop.f32.mrb[0].mxu0
      %v1533 = vadd.f32 %v1478, %v1532
      %v1534 = vpop.f32.mrb[0].mxu0
      %1535 = vdwg.mxu0
      %v1536 = vmax.f32 %v1530, 0.0
      %v1537 = vmax.f32 %v1533, 0.0
      %v1538 = vpack.c.bf16 %v1537, %v1536
      %v1539 = vld [vmem:[%s665] sm:$0xf]
      %v1540 = vld [vmem:[%s665 + $0x4] sm:$0xf]
      %v1541 = vld [vmem:[%s665 + $0x8] sm:$0xf]
      %v1542 = vld [vmem:[%s665 + $0xc] sm:$0xf]
      %v1543 = vld [vmem:[%s665 + $0x10] sm:$0xf]
      %v1544 = vld [vmem:[%s665 + $0x14] sm:$0xf]
      %v1545 = vld [vmem:[%s665 + $0x18] sm:$0xf]
      %v1546 = vld [vmem:[%s665 + $0x1c] sm:$0xf]
      %v1547 = vld [vmem:[%s665 + $0x20] sm:$0xf]
      %v1548 = vld [vmem:[%s665 + $0x24] sm:$0xf]
      %v1549 = vld [vmem:[%s665 + $0x28] sm:$0xf]
      %v1550 = vld [vmem:[%s665 + $0x2c] sm:$0xf]
      %v1551 = vld [vmem:[%s665 + $0x30] sm:$0xf]
      %v1552 = vld [vmem:[%s665 + $0x34] sm:$0xf]
      %v1553 = vld [vmem:[%s665 + $0x38] sm:$0xf]
      %v1554 = vld [vmem:[%s665 + $0x3c] sm:$0xf]
      %v1555 = vld [vmem:[%s668] sm:$0x1]
      %v1557 = vlaneseq
      %v1558 = vshrl.u32 %v1557, 7
      %v1559 = vsub.s32 0, %v1558
      %v1560 = vrot.slane %v1555, %v1559
      %v1578 = vunpack.c.l.b16 %v1539
      %v1579 = vunpack.c.l.b16 %v1540
      %v1580 = vunpack.c.l.b16 %v1541
      %v1581 = vunpack.c.l.b16 %v1542
      %v1582 = vunpack.c.l.b16 %v1543
      %v1583 = vunpack.c.l.b16 %v1544
      %v1584 = vunpack.c.l.b16 %v1545
      %v1585 = vunpack.c.l.b16 %v1546
      %v1586 = vunpack.c.l.b16 %v1547
      %v1587 = vunpack.c.l.b16 %v1548
      %v1588 = vunpack.c.l.b16 %v1549
      %v1589 = vunpack.c.l.b16 %v1550
      %v1590 = vunpack.c.l.b16 %v1551
      %v1591 = vunpack.c.l.b16 %v1552
      %v1592 = vunpack.c.l.b16 %v1553
      %v1593 = vunpack.c.l.b16 %v1554
      %v1594 = vpack.c.b16 %v1579, %v1578
      %v1595 = vpack.c.b16 %v1581, %v1580
      %v1596 = vpack.c.b16 %v1583, %v1582
      %v1597 = vpack.c.b16 %v1585, %v1584
      %v1598 = vpack.c.b16 %v1587, %v1586
      %v1599 = vpack.c.b16 %v1589, %v1588
      %v1600 = vpack.c.b16 %v1591, %v1590
      %v1601 = vpack.c.b16 %v1593, %v1592
      %1610 = vmatprep.subr.bf16.mxu0 0
      %1611 = vmatpush1.bf16.msra.mxu0 %v1594
      %1612 = vmatprep.subr.bf16.mxu0 0
      %1613 = vmatpush1.bf16.msra.mxu0 %v1595
      %1614 = vmatprep.subr.bf16.mxu0 0
      %1615 = vmatpush1.bf16.msra.mxu0 %v1596
      %1616 = vmatprep.subr.bf16.mxu0 0
      %1617 = vmatpush1.bf16.msra.mxu0 %v1597
      %1618 = vmatprep.subr.bf16.mxu0 0
      %1619 = vmatpush1.bf16.msra.mxu0 %v1598
      %1620 = vmatprep.subr.bf16.mxu0 0
      %1621 = vmatpush1.bf16.msra.mxu0 %v1599
      %1622 = vmatprep.subr.bf16.mxu0 0
      %1623 = vmatpush1.bf16.msra.mxu0 %v1600
      %1624 = vmatprep.subr.bf16.mxu0 0
      %1625 = vmatpush1.bf16.msra.mxu0 %v1601
      %1626 = vmatprep.subr.bf16.mxu0 0
      %1627 = vmatpush1.bf16.msra.mxu0 0
      %1628 = vmatprep.subr.bf16.mxu0 0
      %1629 = vmatpush1.bf16.msra.mxu0 0
      %1630 = vmatprep.subr.bf16.mxu0 0
      %1631 = vmatpush1.bf16.msra.mxu0 0
      %1632 = vmatprep.subr.bf16.mxu0 0
      %1633 = vmatpush1.bf16.msra.mxu0 0
      %1634 = vmatprep.subr.bf16.mxu0 0
      %1635 = vmatpush1.bf16.msra.mxu0 0
      %1636 = vmatprep.subr.bf16.mxu0 0
      %1637 = vmatpush1.bf16.msra.mxu0 0
      %1638 = vmatprep.subr.bf16.mxu0 0
      %1639 = vmatpush1.bf16.msra.mxu0 0
      %1640 = vmatprep.subr.bf16.mxu0 0
      %1641 = vmatpush1.bf16.msra.mxu0 0
      %1642 = vmatprep.mubr.bf16.mxu0 0
      %1643 = vmatmul.mubr.bf16.gmra.mrb[0].mxu0 %v1538
      %v1644 = vpop.f32.mrb[0].mxu0
      %v1645 = vadd.f32 %v1560, %v1644
      %v1646 = vpop.f32.mrb[0].mxu0
      %v1647 = vpop.f32.mrb[0].mxu0
      %v1648 = vadd.f32 %v1560, %v1647
      %v1649 = vpop.f32.mrb[0].mxu0
      %1650 = vdwg.mxu0
      %v1651 = vadd.f32 %v1422, %v1645
      %v1652 = vadd.f32 %v1423, %v1648
      %1653 = vst.msk [vmem:[%s673] sm:$0xff] %vm689, %v1651
      %1654 = vst.msk [vmem:[%s673 + $0x8] sm:$0xff] %vm689, %v1652
      %s1655 = smul.u32 2, %s29
      %p1656 = scmp.lt.s32.totalorder %s1655, 1
      %s1657 = scalar_select %p1656, %s1655, 1
      %s1658 = smul.addr %s1657, 8
      %s1659 = scalar_lea.vmem %s14, %s1658
      // Predicated region
      $region81: #{lint_forward.4} parent=75 // pred_check
        %p1660 = pneg %p414
      $region82: #{lint_forward.4} parent=75 // pred_check_branch
        %1662 = sbr.rel (%p1660) target = $region84
      $region83: #{lint_forward.4} parent=75 // pred_region
        %s1663 = smul.u32 2, %s29
      $region84: #{lint_forward.4} parent=75 // pred_fallthru
        _
      // Predicated region
      $region85: #{lint_forward.4} parent=75 // pred_check
        %p1664 = pneg %p414
      $region86: #{lint_forward.4} parent=75 // pred_check_branch
        %1666 = sbr.rel (%p1664) target = $region88
      $region87: #{lint_forward.4} parent=75 // pred_region
        %s1667 = smul.u32 2, %s29
        %p1668 = scmp.lt.s32.totalorder %s1667, 1
        %s1669 = scalar_select %p1668, %s1667, 1
        %s1670 = smul.addr %s1669, 8
        %s1671 = scalar_lea.vmem %s14, %s1670
      $region88: #{lint_forward.4} parent=75 // pred_fallthru
        _
    $region76: #{lint_forward.4} parent=5 // pred_fallthru
      _
    %p1672 = scmp.le.s32.totalorder 2, %s20
    // Predicated region
    $region89: #{lint_forward.4} parent=5 // pred_check
      %p1673 = pneg %p1672
    $region90: #{lint_forward.4} parent=5 // pred_check_branch
      %1675 = sbr.rel (%p1673) target = $region92
    $region91: #{lint_forward.4} parent=5 // pred_region
      %s1676 = ssub.s32 %s20, 2
    $region92: #{lint_forward.4} parent=5 // pred_fallthru
      _
  $region6: #{lint_forward.4} parent=0 // loop_footer
    %s24 = sadd.s32 1, %s20
  $region7: #{lint_forward.4} parent=0 // loop_footer_branch
    %19 = sbr.rel target = $region3
  $region8: #{lint_forward.4} parent=0 // loop_exit
    _

</llo_original>
